<compile_context>
chip_gen: v7x
topology: tpu7x:2x2x1
jax: 0.10.0
libtpu: 0.0.40
codegen_flags: <defaults>
</compile_context>

<pallas_src>
import functools

import jax
import jax.numpy as jnp
from jax.experimental import pallas as pl
from jax.experimental.pallas import tpu as pltpu


def _pick_hw_tile(hw, c, itemsize=4, target_lanes=512, vmem_budget=8 * 1024 * 1024):
    """Largest multiple of 128 dividing hw, capped by target_lanes and a
    double-buffered VMEM budget.  Falls back to the full hw (single block,
    full-dim exemption to the 128-lane rule) when hw % 128 != 0."""
    if hw % 128 != 0:
        return hw
    cap = max(128, min(target_lanes, vmem_budget // (2 * c * itemsize)))
    best = 128
    t = 128
    while t <= hw and t <= cap:
        if hw % t == 0:
            best = t
        t += 128
    return best


def paunit_kernel(x_ref, wc1_ref, bc1_ref, wc2_ref, bc2_ref, wf1_ref, wf2_ref,
                  o_ref, sum_v_acc, max_v_acc, sum_x_acc, sum_wx_acc,
                  *, hw_total, c):
    k_step = pl.program_id(1)
    n_steps = pl.num_programs(1)

    # --- init running accumulators at the first HW tile of this batch element ---
    @pl.when(k_step == 0)
    def _init():
        sum_v_acc[...] = jnp.zeros_like(sum_v_acc)
        sum_x_acc[...] = jnp.zeros_like(sum_x_acc)
        sum_wx_acc[...] = jnp.zeros_like(sum_wx_acc)
        max_v_acc[...] = jnp.full_like(max_v_acc, -jnp.inf)

    xb = x_ref[0].astype(jnp.float32)                     # (C, THW)
    thw = xb.shape[-1]

    wc1 = wc1_ref[...].astype(jnp.float32)                # (C, C)
    wc2 = wc2_ref[...].astype(jnp.float32)                # (C, C)
    bc1 = bc1_ref[...].astype(jnp.float32)                # (C, 1)
    bc2 = bc2_ref[...].astype(jnp.float32)                # (C, 1)

    # 1x1 convs == per-pixel channel matmuls; weight (Cout,Cin) @ x (Cin,THW):
    # natural contraction, no transposed weight tiles.
    y = jnp.maximum(jnp.dot(wc1, xb, preferred_element_type=jnp.float32) + bc1, 0.0)
    kk = jnp.dot(wc2, y, preferred_element_type=jnp.float32) + bc2
    v = kk * xb                                           # (C, THW)

    # SA_Cell weight per pixel: relu(channel-mean + channel-max) -> (1, THW).
    vs = jnp.maximum(
        jnp.mean(v, axis=0, keepdims=True) + jnp.max(v, axis=0, keepdims=True), 0.0)
    wx = vs * xb                                          # (C, THW)

    # Fold this HW tile elementwise into 128-lane accumulators (pure VPU adds/maxes);
    # the single cross-lane (XLU) reduce is deferred to the finalize step.
    n_full, rem = thw // 128, thw % 128
    spans = [(j * 128, 128) for j in range(n_full)]
    if rem:
        spans.append((n_full * 128, rem))
    for start, width in spans:
        sl = slice(start, start + width)
        sum_v_acc[:, :width] += v[:, sl]
        max_v_acc[:, :width] = jnp.maximum(max_v_acc[:, :width], v[:, sl])
        sum_x_acc[:, :width] += xb[:, sl]
        sum_wx_acc[:, :width] += wx[:, sl]

    # --- finalize: cross-lane reduce, tiny SE MLP, write (1, 2C, 1) output ---
    @pl.when(k_step == n_steps - 1)
    def _finalize():
        inv_hw = jnp.float32(1.0 / hw_total)
        sum_v = jnp.sum(sum_v_acc[...], axis=-1, keepdims=True)    # (C, 1)
        max_v = jnp.max(max_v_acc[...], axis=-1, keepdims=True)    # (C, 1)
        sum_x = jnp.sum(sum_x_acc[...], axis=-1, keepdims=True)    # (C, 1)
        sum_wx = jnp.sum(sum_wx_acc[...], axis=-1, keepdims=True)  # (C, 1)

        # CA_Cell MLP (no biases); weights stay resident, runs once per batch item.
        z = sum_v * inv_hw + max_v                                  # (C, 1)
        zb = jnp.broadcast_to(z, (c, 128))                          # lane-dense operand
        h = jnp.maximum(
            jnp.dot(wf1_ref[...].astype(jnp.float32), zb,
                    preferred_element_type=jnp.float32), 0.0)       # (Ch, 128)
        vc = jnp.dot(wf2_ref[...].astype(jnp.float32), h,
                     preferred_element_type=jnp.float32)[:, :1]     # (C, 1)

        out_ca = vc * (sum_x * inv_hw)     # gap(vc * x) == vc * mean_hw(x)
        out_sa = sum_wx * inv_hw           # gap(vs * x)
        o_ref[...] = jnp.concatenate([out_ca, out_sa], axis=0)[None].astype(o_ref.dtype)


def paunit(x_nchw, w_c1, b_c1, w_c2, b_c2, w_f1, w_f2):
    """x: (B,C,H,W) f32.  conv weights (C,C) + biases (C,), fc1 (Ch,C), fc2 (C,Ch).
    Returns (B, 2C, 1, 1), matching PAUnit.forward."""
    B, C, H, W = x_nchw.shape
    HW = H * W
    Ch = w_f1.shape[0]
    x = x_nchw.reshape(B, C, HW)

    thw = _pick_hw_tile(HW, C)
    nk = HW // thw

    kernel = functools.partial(paunit_kernel, hw_total=HW, c=C)

    flops = 2 * 2 * C * C * HW * B + 12 * B * C * HW
    bytes_accessed = 4 * (B * C * HW + 2 * C * C + 2 * C + 2 * Ch * C + B * 2 * C)

    out = pl.pallas_call(
        kernel,
        out_shape=jax.ShapeDtypeStruct((B, 2 * C, 1), x.dtype),
        grid_spec=pltpu.PrefetchScalarGridSpec(
            num_scalar_prefetch=0,
            grid=(B, nk),
            in_specs=[
                pl.BlockSpec((1, C, thw), lambda b, k: (b, 0, k)),   # x: streamed over HW
                pl.BlockSpec((C, C), lambda b, k: (0, 0)),           # conv1 weight (resident)
                pl.BlockSpec((C, 1), lambda b, k: (0, 0)),           # conv1 bias
                pl.BlockSpec((C, C), lambda b, k: (0, 0)),           # conv2 weight
                pl.BlockSpec((C, 1), lambda b, k: (0, 0)),           # conv2 bias
                pl.BlockSpec((Ch, C), lambda b, k: (0, 0)),          # fc1 weight
                pl.BlockSpec((C, Ch), lambda b, k: (0, 0)),          # fc2 weight
            ],
            out_specs=pl.BlockSpec((1, 2 * C, 1), lambda b, k: (b, 0, 0)),
            scratch_shapes=[pltpu.VMEM((C, 128), jnp.float32)] * 4,
        ),
        compiler_params=pltpu.CompilerParams(
            dimension_semantics=("parallel", "arbitrary"),
            vmem_limit_bytes=32 * 1024 * 1024,
        ),
        cost_estimate=pl.CostEstimate(
            flops=int(flops), transcendentals=0, bytes_accessed=int(bytes_accessed)),
    )(x, w_c1, b_c1.reshape(C, 1), w_c2, b_c2.reshape(C, 1), w_f1, w_f2)

    return out.reshape(B, 2 * C, 1, 1)


def paunit_ref(x, w_c1, b_c1, w_c2, b_c2, w_f1, w_f2):
    """Pure-JAX reference of PAUnit.forward (PyTorch semantics, NCHW)."""
    y = jnp.einsum('oc,bchw->bohw', w_c1, x) + b_c1[None, :, None, None]
    y = jnp.maximum(y, 0.0)
    k = jnp.einsum('oc,bchw->bohw', w_c2, y) + b_c2[None, :, None, None]
    v = k * x
    # CA_Cell
    z = jnp.mean(v, axis=(2, 3)) + jnp.max(v, axis=(2, 3))           # (B, C)
    h = jnp.maximum(z @ w_f1.T, 0.0)
    vc = (h @ w_f2.T)[:, :, None, None]                              # (B, C, 1, 1)
    # SA_Cell
    vs = jnp.maximum(jnp.mean(v, axis=1, keepdims=True)
                     + jnp.max(v, axis=1, keepdims=True), 0.0)       # (B, 1, H, W)
    out1 = jnp.mean(vc * x, axis=(2, 3), keepdims=True)
    out2 = jnp.mean(vs * x, axis=(2, 3), keepdims=True)
    return jnp.concatenate([out1, out2], axis=1)                     # (B, 2C, 1, 1)


if __name__ == "__main__":
    key = jax.random.PRNGKey(0)
    B, C, H, W = 2, 32, 32, 32            # channels=32 -> fc hidden = round(32/16) = 2
    Ch = max(1, round(C / 16))

    ks = jax.random.split(key, 7)
    sc = 1.0 / float(jnp.sqrt(jnp.float32(C)))
    x = jax.random.normal(ks[0], (B, C, H, W), dtype=jnp.float32)
    w_c1 = jax.random.normal(ks[1], (C, C), dtype=jnp.float32) * sc
    b_c1 = jax.random.normal(ks[2], (C,), dtype=jnp.float32) * 0.1
    w_c2 = jax.random.normal(ks[3], (C, C), dtype=jnp.float32) * sc
    b_c2 = jax.random.normal(ks[4], (C,), dtype=jnp.float32) * 0.1
    w_f1 = jax.random.normal(ks[5], (Ch, C), dtype=jnp.float32) * sc
    w_f2 = jax.random.normal(ks[6], (C, Ch), dtype=jnp.float32) * (1.0 / float(jnp.sqrt(jnp.float32(Ch))))

    out = paunit(x, w_c1, b_c1, w_c2, b_c2, w_f1, w_f2)
    out = jax.block_until_ready(out)

    ref = paunit_ref(x, w_c1, b_c1, w_c2, b_c2, w_f1, w_f2)
    assert out.shape == (B, 2 * C, 1, 1), out.shape
    max_err = float(jnp.max(jnp.abs(out - ref)))
    assert jnp.allclose(out, ref, atol=3e-3, rtol=3e-3), max_err

    print("KERNEL_OK")
</pallas_src>

<mosaic_0001>
module attributes {stable_mosaic.version = 11 : i64} {
  func.func @paunit_kernel(%arg0: i32, %arg1: i32, %arg2: memref<1x32x512xf32, #tpu.memory_space<vmem>>, %arg3: memref<32x32xf32, #tpu.memory_space<vmem>>, %arg4: memref<32x1xf32, #tpu.memory_space<vmem>>, %arg5: memref<32x32xf32, #tpu.memory_space<vmem>>, %arg6: memref<32x1xf32, #tpu.memory_space<vmem>>, %arg7: memref<2x32xf32, #tpu.memory_space<vmem>>, %arg8: memref<32x2xf32, #tpu.memory_space<vmem>>, %arg9: memref<1x64x1xf32, #tpu.memory_space<vmem>>, %arg10: memref<32x128xf32, #tpu.memory_space<vmem>>, %arg11: memref<32x128xf32, #tpu.memory_space<vmem>>, %arg12: memref<32x128xf32, #tpu.memory_space<vmem>>, %arg13: memref<32x128xf32, #tpu.memory_space<vmem>>) attributes {dimension_semantics = [#tpu.dimension_semantics<parallel>, #tpu.dimension_semantics<arbitrary>], iteration_bounds = array<i64: 2, 2>, scalar_prefetch = 0 : i64, scratch_operands = 4 : i64, tpu.core_type = #tpu.core_type<tc>, window_params = [{transform_indices = @transform_0, window_bounds = array<i64: 1, 32, 512>}, {pipeline_mode = #tpu.pipeline_mode<synchronous>, transform_indices = @transform_1, window_bounds = array<i64: 32, 32>}, {pipeline_mode = #tpu.pipeline_mode<synchronous>, transform_indices = @transform_2, window_bounds = array<i64: 32, 1>}, {pipeline_mode = #tpu.pipeline_mode<synchronous>, transform_indices = @transform_3, window_bounds = array<i64: 32, 32>}, {pipeline_mode = #tpu.pipeline_mode<synchronous>, transform_indices = @transform_4, window_bounds = array<i64: 32, 1>}, {pipeline_mode = #tpu.pipeline_mode<synchronous>, transform_indices = @transform_5, window_bounds = array<i64: 2, 32>}, {pipeline_mode = #tpu.pipeline_mode<synchronous>, transform_indices = @transform_6, window_bounds = array<i64: 32, 2>}, {transform_indices = @transform_7, window_bounds = array<i64: 1, 64, 1>}]} {
    %c0_i32 = arith.constant 0 : i32
    %0 = arith.cmpi eq, %arg1, %c0_i32 : i32
    %1 = arith.extui %0 : i1 to i32
    %c0_i32_0 = arith.constant 0 : i32
    %2 = arith.cmpi ne, %1, %c0_i32_0 : i32
    scf.if %2 {
      %cst_82 = arith.constant 0.000000e+00 : f32
      %96 = vector.broadcast %cst_82 : f32 to vector<32x128xf32>
      %c0_83 = arith.constant 0 : index
      %c0_84 = arith.constant 0 : index
      %97 = vector.load %arg10[%c0_83, %c0_84] : memref<32x128xf32, #tpu.memory_space<vmem>>, vector<32x128xf32>
      tpu.vector_store %arg10[%c0_83, %c0_84], %96 {strides = array<i32>} : memref<32x128xf32, #tpu.memory_space<vmem>>, vector<32x128xf32>,
      %cst_85 = arith.constant 0.000000e+00 : f32
      %98 = vector.broadcast %cst_85 : f32 to vector<32x128xf32>
      %c0_86 = arith.constant 0 : index
      %c0_87 = arith.constant 0 : index
      %99 = vector.load %arg12[%c0_86, %c0_87] : memref<32x128xf32, #tpu.memory_space<vmem>>, vector<32x128xf32>
      tpu.vector_store %arg12[%c0_86, %c0_87], %98 {strides = array<i32>} : memref<32x128xf32, #tpu.memory_space<vmem>>, vector<32x128xf32>,
      %cst_88 = arith.constant 0.000000e+00 : f32
      %100 = vector.broadcast %cst_88 : f32 to vector<32x128xf32>
      %c0_89 = arith.constant 0 : index
      %c0_90 = arith.constant 0 : index
      %101 = vector.load %arg13[%c0_89, %c0_90] : memref<32x128xf32, #tpu.memory_space<vmem>>, vector<32x128xf32>
      tpu.vector_store %arg13[%c0_89, %c0_90], %100 {strides = array<i32>} : memref<32x128xf32, #tpu.memory_space<vmem>>, vector<32x128xf32>,
      %cst_91 = arith.constant 0xFF800000 : f32
      %102 = vector.broadcast %cst_91 : f32 to vector<32x128xf32>
      %c0_92 = arith.constant 0 : index
      %c0_93 = arith.constant 0 : index
      %103 = vector.load %arg11[%c0_92, %c0_93] : memref<32x128xf32, #tpu.memory_space<vmem>>, vector<32x128xf32>
      tpu.vector_store %arg11[%c0_92, %c0_93], %102 {strides = array<i32>} : memref<32x128xf32, #tpu.memory_space<vmem>>, vector<32x128xf32>,
    } else {
    }
    %c0 = arith.constant 0 : index
    %c0_1 = arith.constant 0 : index
    %c0_2 = arith.constant 0 : index
    %3 = vector.load %arg2[%c0, %c0_1, %c0_2] : memref<1x32x512xf32, #tpu.memory_space<vmem>>, vector<1x32x512xf32>
    %4 = vector.shape_cast %3 : vector<1x32x512xf32> to vector<32x512xf32>
    %c0_3 = arith.constant 0 : index
    %c0_4 = arith.constant 0 : index
    %5 = vector.load %arg3[%c0_3, %c0_4] : memref<32x32xf32, #tpu.memory_space<vmem>>, vector<32x32xf32>
    %c0_5 = arith.constant 0 : index
    %c0_6 = arith.constant 0 : index
    %6 = vector.load %arg5[%c0_5, %c0_6] : memref<32x32xf32, #tpu.memory_space<vmem>>, vector<32x32xf32>
    %c0_7 = arith.constant 0 : index
    %c0_8 = arith.constant 0 : index
    %7 = vector.load %arg4[%c0_7, %c0_8] : memref<32x1xf32, #tpu.memory_space<vmem>>, vector<32x1xf32>
    %c0_9 = arith.constant 0 : index
    %c0_10 = arith.constant 0 : index
    %8 = vector.load %arg6[%c0_9, %c0_10] : memref<32x1xf32, #tpu.memory_space<vmem>>, vector<32x1xf32>
    %cst = arith.constant dense<0.000000e+00> : vector<32x512xf32>
    %9 = tpu.matmul %5, %4, %cst {dimension_numbers = #tpu.dot_dimension_numbers<[1], [0], [0], [1], [0, 0, 1, 1], [], []>} : vector<32x32xf32>, vector<32x512xf32>, vector<32x512xf32> -> vector<32x512xf32>
    %10 = vector.broadcast %7 : vector<32x1xf32> to vector<32x512xf32>
    %11 = arith.addf %9, %10 : vector<32x512xf32>
    %cst_11 = arith.constant 0.000000e+00 : f32
    %12 = vector.broadcast %cst_11 : f32 to vector<32x512xf32>
    %13 = arith.maximumf %11, %12 : vector<32x512xf32>
    %cst_12 = arith.constant dense<0.000000e+00> : vector<32x512xf32>
    %14 = tpu.matmul %6, %13, %cst_12 {dimension_numbers = #tpu.dot_dimension_numbers<[1], [0], [0], [1], [0, 0, 1, 1], [], []>} : vector<32x32xf32>, vector<32x512xf32>, vector<32x512xf32> -> vector<32x512xf32>
    %15 = vector.broadcast %8 : vector<32x1xf32> to vector<32x512xf32>
    %16 = arith.addf %14, %15 : vector<32x512xf32>
    %17 = arith.mulf %16, %4 : vector<32x512xf32>
    %cst_13 = arith.constant dense<0.000000e+00> : vector<512xf32>
    %18 = vector.multi_reduction <add>, %17, %cst_13 [0] : vector<32x512xf32> to vector<512xf32>
    %19 = vector.shape_cast %18 : vector<512xf32> to vector<1x512xf32>
    %cst_14 = arith.constant 3.200000e+01 : f32
    %20 = vector.broadcast %cst_14 : f32 to vector<1x512xf32>
    %21 = arith.divf %19, %20 : vector<1x512xf32>
    %cst_15 = arith.constant dense<0xFF800000> : vector<512xf32>
    %22 = vector.multi_reduction <maximumf>, %17, %cst_15 [0] : vector<32x512xf32> to vector<512xf32>
    %23 = vector.shape_cast %22 : vector<512xf32> to vector<1x512xf32>
    %24 = arith.addf %21, %23 : vector<1x512xf32>
    %cst_16 = arith.constant 0.000000e+00 : f32
    %25 = vector.broadcast %cst_16 : f32 to vector<1x512xf32>
    %26 = arith.maximumf %24, %25 : vector<1x512xf32>
    %27 = vector.broadcast %26 : vector<1x512xf32> to vector<32x512xf32>
    %28 = arith.mulf %27, %4 : vector<32x512xf32>
    %c0_17 = arith.constant 0 : index
    %c0_18 = arith.constant 0 : index
    %29 = vector.load %arg10[%c0_17, %c0_18] : memref<32x128xf32, #tpu.memory_space<vmem>>, vector<32x128xf32>
    %30 = vector.extract_strided_slice %17 {offsets = [0, 0], sizes = [32, 128], strides = [1, 1]} : vector<32x512xf32> to vector<32x128xf32>
    %31 = arith.addf %29, %30 : vector<32x128xf32>
    %c0_19 = arith.constant 0 : index
    %c0_20 = arith.constant 0 : index
    %32 = vector.load %arg10[%c0_19, %c0_20] : memref<32x128xf32, #tpu.memory_space<vmem>>, vector<32x128xf32>
    tpu.vector_store %arg10[%c0_19, %c0_20], %31 {strides = array<i32>} : memref<32x128xf32, #tpu.memory_space<vmem>>, vector<32x128xf32>,
    %c0_21 = arith.constant 0 : index
    %c0_22 = arith.constant 0 : index
    %33 = vector.load %arg11[%c0_21, %c0_22] : memref<32x128xf32, #tpu.memory_space<vmem>>, vector<32x128xf32>
    %34 = vector.extract_strided_slice %17 {offsets = [0, 0], sizes = [32, 128], strides = [1, 1]} : vector<32x512xf32> to vector<32x128xf32>
    %35 = arith.maximumf %33, %34 : vector<32x128xf32>
    %c0_23 = arith.constant 0 : index
    %c0_24 = arith.constant 0 : index
    %36 = vector.load %arg11[%c0_23, %c0_24] : memref<32x128xf32, #tpu.memory_space<vmem>>, vector<32x128xf32>
    tpu.vector_store %arg11[%c0_23, %c0_24], %35 {strides = array<i32>} : memref<32x128xf32, #tpu.memory_space<vmem>>, vector<32x128xf32>,
    %c0_25 = arith.constant 0 : index
    %c0_26 = arith.constant 0 : index
    %37 = vector.load %arg12[%c0_25, %c0_26] : memref<32x128xf32, #tpu.memory_space<vmem>>, vector<32x128xf32>
    %38 = vector.extract_strided_slice %4 {offsets = [0, 0], sizes = [32, 128], strides = [1, 1]} : vector<32x512xf32> to vector<32x128xf32>
    %39 = arith.addf %37, %38 : vector<32x128xf32>
    %c0_27 = arith.constant 0 : index
    %c0_28 = arith.constant 0 : index
    %40 = vector.load %arg12[%c0_27, %c0_28] : memref<32x128xf32, #tpu.memory_space<vmem>>, vector<32x128xf32>
    tpu.vector_store %arg12[%c0_27, %c0_28], %39 {strides = array<i32>} : memref<32x128xf32, #tpu.memory_space<vmem>>, vector<32x128xf32>,
    %c0_29 = arith.constant 0 : index
    %c0_30 = arith.constant 0 : index
    %41 = vector.load %arg13[%c0_29, %c0_30] : memref<32x128xf32, #tpu.memory_space<vmem>>, vector<32x128xf32>
    %42 = vector.extract_strided_slice %28 {offsets = [0, 0], sizes = [32, 128], strides = [1, 1]} : vector<32x512xf32> to vector<32x128xf32>
    %43 = arith.addf %41, %42 : vector<32x128xf32>
    %c0_31 = arith.constant 0 : index
    %c0_32 = arith.constant 0 : index
    %44 = vector.load %arg13[%c0_31, %c0_32] : memref<32x128xf32, #tpu.memory_space<vmem>>, vector<32x128xf32>
    tpu.vector_store %arg13[%c0_31, %c0_32], %43 {strides = array<i32>} : memref<32x128xf32, #tpu.memory_space<vmem>>, vector<32x128xf32>,
    %c0_33 = arith.constant 0 : index
    %c0_34 = arith.constant 0 : index
    %45 = vector.load %arg10[%c0_33, %c0_34] : memref<32x128xf32, #tpu.memory_space<vmem>>, vector<32x128xf32>
    %46 = vector.extract_strided_slice %17 {offsets = [0, 128], sizes = [32, 128], strides = [1, 1]} : vector<32x512xf32> to vector<32x128xf32>
    %47 = arith.addf %45, %46 : vector<32x128xf32>
    %c0_35 = arith.constant 0 : index
    %c0_36 = arith.constant 0 : index
    %48 = vector.load %arg10[%c0_35, %c0_36] : memref<32x128xf32, #tpu.memory_space<vmem>>, vector<32x128xf32>
    tpu.vector_store %arg10[%c0_35, %c0_36], %47 {strides = array<i32>} : memref<32x128xf32, #tpu.memory_space<vmem>>, vector<32x128xf32>,
    %c0_37 = arith.constant 0 : index
    %c0_38 = arith.constant 0 : index
    %49 = vector.load %arg11[%c0_37, %c0_38] : memref<32x128xf32, #tpu.memory_space<vmem>>, vector<32x128xf32>
    %50 = vector.extract_strided_slice %17 {offsets = [0, 128], sizes = [32, 128], strides = [1, 1]} : vector<32x512xf32> to vector<32x128xf32>
    %51 = arith.maximumf %49, %50 : vector<32x128xf32>
    %c0_39 = arith.constant 0 : index
    %c0_40 = arith.constant 0 : index
    %52 = vector.load %arg11[%c0_39, %c0_40] : memref<32x128xf32, #tpu.memory_space<vmem>>, vector<32x128xf32>
    tpu.vector_store %arg11[%c0_39, %c0_40], %51 {strides = array<i32>} : memref<32x128xf32, #tpu.memory_space<vmem>>, vector<32x128xf32>,
    %c0_41 = arith.constant 0 : index
    %c0_42 = arith.constant 0 : index
    %53 = vector.load %arg12[%c0_41, %c0_42] : memref<32x128xf32, #tpu.memory_space<vmem>>, vector<32x128xf32>
    %54 = vector.extract_strided_slice %4 {offsets = [0, 128], sizes = [32, 128], strides = [1, 1]} : vector<32x512xf32> to vector<32x128xf32>
    %55 = arith.addf %53, %54 : vector<32x128xf32>
    %c0_43 = arith.constant 0 : index
    %c0_44 = arith.constant 0 : index
    %56 = vector.load %arg12[%c0_43, %c0_44] : memref<32x128xf32, #tpu.memory_space<vmem>>, vector<32x128xf32>
    tpu.vector_store %arg12[%c0_43, %c0_44], %55 {strides = array<i32>} : memref<32x128xf32, #tpu.memory_space<vmem>>, vector<32x128xf32>,
    %c0_45 = arith.constant 0 : index
    %c0_46 = arith.constant 0 : index
    %57 = vector.load %arg13[%c0_45, %c0_46] : memref<32x128xf32, #tpu.memory_space<vmem>>, vector<32x128xf32>
    %58 = vector.extract_strided_slice %28 {offsets = [0, 128], sizes = [32, 128], strides = [1, 1]} : vector<32x512xf32> to vector<32x128xf32>
    %59 = arith.addf %57, %58 : vector<32x128xf32>
    %c0_47 = arith.constant 0 : index
    %c0_48 = arith.constant 0 : index
    %60 = vector.load %arg13[%c0_47, %c0_48] : memref<32x128xf32, #tpu.memory_space<vmem>>, vector<32x128xf32>
    tpu.vector_store %arg13[%c0_47, %c0_48], %59 {strides = array<i32>} : memref<32x128xf32, #tpu.memory_space<vmem>>, vector<32x128xf32>,
    %c0_49 = arith.constant 0 : index
    %c0_50 = arith.constant 0 : index
    %61 = vector.load %arg10[%c0_49, %c0_50] : memref<32x128xf32, #tpu.memory_space<vmem>>, vector<32x128xf32>
    %62 = vector.extract_strided_slice %17 {offsets = [0, 256], sizes = [32, 128], strides = [1, 1]} : vector<32x512xf32> to vector<32x128xf32>
    %63 = arith.addf %61, %62 : vector<32x128xf32>
    %c0_51 = arith.constant 0 : index
    %c0_52 = arith.constant 0 : index
    %64 = vector.load %arg10[%c0_51, %c0_52] : memref<32x128xf32, #tpu.memory_space<vmem>>, vector<32x128xf32>
    tpu.vector_store %arg10[%c0_51, %c0_52], %63 {strides = array<i32>} : memref<32x128xf32, #tpu.memory_space<vmem>>, vector<32x128xf32>,
    %c0_53 = arith.constant 0 : index
    %c0_54 = arith.constant 0 : index
    %65 = vector.load %arg11[%c0_53, %c0_54] : memref<32x128xf32, #tpu.memory_space<vmem>>, vector<32x128xf32>
    %66 = vector.extract_strided_slice %17 {offsets = [0, 256], sizes = [32, 128], strides = [1, 1]} : vector<32x512xf32> to vector<32x128xf32>
    %67 = arith.maximumf %65, %66 : vector<32x128xf32>
    %c0_55 = arith.constant 0 : index
    %c0_56 = arith.constant 0 : index
    %68 = vector.load %arg11[%c0_55, %c0_56] : memref<32x128xf32, #tpu.memory_space<vmem>>, vector<32x128xf32>
    tpu.vector_store %arg11[%c0_55, %c0_56], %67 {strides = array<i32>} : memref<32x128xf32, #tpu.memory_space<vmem>>, vector<32x128xf32>,
    %c0_57 = arith.constant 0 : index
    %c0_58 = arith.constant 0 : index
    %69 = vector.load %arg12[%c0_57, %c0_58] : memref<32x128xf32, #tpu.memory_space<vmem>>, vector<32x128xf32>
    %70 = vector.extract_strided_slice %4 {offsets = [0, 256], sizes = [32, 128], strides = [1, 1]} : vector<32x512xf32> to vector<32x128xf32>
    %71 = arith.addf %69, %70 : vector<32x128xf32>
    %c0_59 = arith.constant 0 : index
    %c0_60 = arith.constant 0 : index
    %72 = vector.load %arg12[%c0_59, %c0_60] : memref<32x128xf32, #tpu.memory_space<vmem>>, vector<32x128xf32>
    tpu.vector_store %arg12[%c0_59, %c0_60], %71 {strides = array<i32>} : memref<32x128xf32, #tpu.memory_space<vmem>>, vector<32x128xf32>,
    %c0_61 = arith.constant 0 : index
    %c0_62 = arith.constant 0 : index
    %73 = vector.load %arg13[%c0_61, %c0_62] : memref<32x128xf32, #tpu.memory_space<vmem>>, vector<32x128xf32>
    %74 = vector.extract_strided_slice %28 {offsets = [0, 256], sizes = [32, 128], strides = [1, 1]} : vector<32x512xf32> to vector<32x128xf32>
    %75 = arith.addf %73, %74 : vector<32x128xf32>
    %c0_63 = arith.constant 0 : index
    %c0_64 = arith.constant 0 : index
    %76 = vector.load %arg13[%c0_63, %c0_64] : memref<32x128xf32, #tpu.memory_space<vmem>>, vector<32x128xf32>
    tpu.vector_store %arg13[%c0_63, %c0_64], %75 {strides = array<i32>} : memref<32x128xf32, #tpu.memory_space<vmem>>, vector<32x128xf32>,
    %c0_65 = arith.constant 0 : index
    %c0_66 = arith.constant 0 : index
    %77 = vector.load %arg10[%c0_65, %c0_66] : memref<32x128xf32, #tpu.memory_space<vmem>>, vector<32x128xf32>
    %78 = vector.extract_strided_slice %17 {offsets = [0, 384], sizes = [32, 128], strides = [1, 1]} : vector<32x512xf32> to vector<32x128xf32>
    %79 = arith.addf %77, %78 : vector<32x128xf32>
    %c0_67 = arith.constant 0 : index
    %c0_68 = arith.constant 0 : index
    %80 = vector.load %arg10[%c0_67, %c0_68] : memref<32x128xf32, #tpu.memory_space<vmem>>, vector<32x128xf32>
    tpu.vector_store %arg10[%c0_67, %c0_68], %79 {strides = array<i32>} : memref<32x128xf32, #tpu.memory_space<vmem>>, vector<32x128xf32>,
    %c0_69 = arith.constant 0 : index
    %c0_70 = arith.constant 0 : index
    %81 = vector.load %arg11[%c0_69, %c0_70] : memref<32x128xf32, #tpu.memory_space<vmem>>, vector<32x128xf32>
    %82 = vector.extract_strided_slice %17 {offsets = [0, 384], sizes = [32, 128], strides = [1, 1]} : vector<32x512xf32> to vector<32x128xf32>
    %83 = arith.maximumf %81, %82 : vector<32x128xf32>
    %c0_71 = arith.constant 0 : index
    %c0_72 = arith.constant 0 : index
    %84 = vector.load %arg11[%c0_71, %c0_72] : memref<32x128xf32, #tpu.memory_space<vmem>>, vector<32x128xf32>
    tpu.vector_store %arg11[%c0_71, %c0_72], %83 {strides = array<i32>} : memref<32x128xf32, #tpu.memory_space<vmem>>, vector<32x128xf32>,
    %c0_73 = arith.constant 0 : index
    %c0_74 = arith.constant 0 : index
    %85 = vector.load %arg12[%c0_73, %c0_74] : memref<32x128xf32, #tpu.memory_space<vmem>>, vector<32x128xf32>
    %86 = vector.extract_strided_slice %4 {offsets = [0, 384], sizes = [32, 128], strides = [1, 1]} : vector<32x512xf32> to vector<32x128xf32>
    %87 = arith.addf %85, %86 : vector<32x128xf32>
    %c0_75 = arith.constant 0 : index
    %c0_76 = arith.constant 0 : index
    %88 = vector.load %arg12[%c0_75, %c0_76] : memref<32x128xf32, #tpu.memory_space<vmem>>, vector<32x128xf32>
    tpu.vector_store %arg12[%c0_75, %c0_76], %87 {strides = array<i32>} : memref<32x128xf32, #tpu.memory_space<vmem>>, vector<32x128xf32>,
    %c0_77 = arith.constant 0 : index
    %c0_78 = arith.constant 0 : index
    %89 = vector.load %arg13[%c0_77, %c0_78] : memref<32x128xf32, #tpu.memory_space<vmem>>, vector<32x128xf32>
    %90 = vector.extract_strided_slice %28 {offsets = [0, 384], sizes = [32, 128], strides = [1, 1]} : vector<32x512xf32> to vector<32x128xf32>
    %91 = arith.addf %89, %90 : vector<32x128xf32>
    %c0_79 = arith.constant 0 : index
    %c0_80 = arith.constant 0 : index
    %92 = vector.load %arg13[%c0_79, %c0_80] : memref<32x128xf32, #tpu.memory_space<vmem>>, vector<32x128xf32>
    tpu.vector_store %arg13[%c0_79, %c0_80], %91 {strides = array<i32>} : memref<32x128xf32, #tpu.memory_space<vmem>>, vector<32x128xf32>,
    %c1_i32 = arith.constant 1 : i32
    %93 = arith.cmpi eq, %arg1, %c1_i32 : i32
    %94 = arith.extui %93 : i1 to i32
    %c0_i32_81 = arith.constant 0 : i32
    %95 = arith.cmpi ne, %94, %c0_i32_81 : i32
    scf.if %95 {
      %c0_82 = arith.constant 0 : index
      %c0_83 = arith.constant 0 : index
      %96 = vector.load %arg10[%c0_82, %c0_83] : memref<32x128xf32, #tpu.memory_space<vmem>>, vector<32x128xf32>
      %cst_84 = arith.constant dense<0.000000e+00> : vector<32xf32>
      %97 = vector.multi_reduction <add>, %96, %cst_84 [1] : vector<32x128xf32> to vector<32xf32>
      %98 = vector.shape_cast %97 : vector<32xf32> to vector<32x1xf32>
      %c0_85 = arith.constant 0 : index
      %c0_86 = arith.constant 0 : index
      %99 = vector.load %arg11[%c0_85, %c0_86] : memref<32x128xf32, #tpu.memory_space<vmem>>, vector<32x128xf32>
      %cst_87 = arith.constant dense<0xFF800000> : vector<32xf32>
      %100 = vector.multi_reduction <maximumf>, %99, %cst_87 [1] : vector<32x128xf32> to vector<32xf32>
      %101 = vector.shape_cast %100 : vector<32xf32> to vector<32x1xf32>
      %c0_88 = arith.constant 0 : index
      %c0_89 = arith.constant 0 : index
      %102 = vector.load %arg12[%c0_88, %c0_89] : memref<32x128xf32, #tpu.memory_space<vmem>>, vector<32x128xf32>
      %cst_90 = arith.constant dense<0.000000e+00> : vector<32xf32>
      %103 = vector.multi_reduction <add>, %102, %cst_90 [1] : vector<32x128xf32> to vector<32xf32>
      %104 = vector.shape_cast %103 : vector<32xf32> to vector<32x1xf32>
      %c0_91 = arith.constant 0 : index
      %c0_92 = arith.constant 0 : index
      %105 = vector.load %arg13[%c0_91, %c0_92] : memref<32x128xf32, #tpu.memory_space<vmem>>, vector<32x128xf32>
      %cst_93 = arith.constant dense<0.000000e+00> : vector<32xf32>
      %106 = vector.multi_reduction <add>, %105, %cst_93 [1] : vector<32x128xf32> to vector<32xf32>
      %107 = vector.shape_cast %106 : vector<32xf32> to vector<32x1xf32>
      %cst_94 = arith.constant 9.765625E-4 : f32
      %108 = vector.broadcast %cst_94 : f32 to vector<32x1xf32>
      %109 = arith.mulf %98, %108 : vector<32x1xf32>
      %110 = arith.addf %109, %101 : vector<32x1xf32>
      %111 = vector.shape_cast %110 : vector<32x1xf32> to vector<32x1xf32>
      %112 = vector.broadcast %111 : vector<32x1xf32> to vector<32x128xf32>
      %c0_95 = arith.constant 0 : index
      %c0_96 = arith.constant 0 : index
      %113 = vector.load %arg7[%c0_95, %c0_96] : memref<2x32xf32, #tpu.memory_space<vmem>>, vector<2x32xf32>
      %cst_97 = arith.constant dense<0.000000e+00> : vector<2x128xf32>
      %114 = tpu.matmul %113, %112, %cst_97 {dimension_numbers = #tpu.dot_dimension_numbers<[1], [0], [0], [1], [0, 0, 1, 1], [], []>} : vector<2x32xf32>, vector<32x128xf32>, vector<2x128xf32> -> vector<2x128xf32>
      %cst_98 = arith.constant 0.000000e+00 : f32
      %115 = vector.broadcast %cst_98 : f32 to vector<2x128xf32>
      %116 = arith.maximumf %114, %115 : vector<2x128xf32>
      %c0_99 = arith.constant 0 : index
      %c0_100 = arith.constant 0 : index
      %117 = vector.load %arg8[%c0_99, %c0_100] : memref<32x2xf32, #tpu.memory_space<vmem>>, vector<32x2xf32>
      %cst_101 = arith.constant dense<0.000000e+00> : vector<32x128xf32>
      %118 = tpu.matmul %117, %116, %cst_101 {dimension_numbers = #tpu.dot_dimension_numbers<[1], [0], [0], [1], [0, 0, 1, 1], [], []>} : vector<32x2xf32>, vector<2x128xf32>, vector<32x128xf32> -> vector<32x128xf32>
      %119 = vector.extract_strided_slice %118 {offsets = [0, 0], sizes = [32, 1], strides = [1, 1]} : vector<32x128xf32> to vector<32x1xf32>
      %cst_102 = arith.constant 9.765625E-4 : f32
      %120 = vector.broadcast %cst_102 : f32 to vector<32x1xf32>
      %121 = arith.mulf %104, %120 : vector<32x1xf32>
      %122 = arith.mulf %119, %121 : vector<32x1xf32>
      %cst_103 = arith.constant 9.765625E-4 : f32
      %123 = vector.broadcast %cst_103 : f32 to vector<32x1xf32>
      %124 = arith.mulf %107, %123 : vector<32x1xf32>
      %125 = tpu.concatenate %122, %124 in 0 : vector<32x1xf32>, vector<32x1xf32> -> vector<64x1xf32>
      %126 = vector.shape_cast %125 : vector<64x1xf32> to vector<1x64x1xf32>
      %c0_104 = arith.constant 0 : index
      %c0_105 = arith.constant 0 : index
      %c0_106 = arith.constant 0 : index
      %127 = vector.load %arg9[%c0_104, %c0_105, %c0_106] : memref<1x64x1xf32, #tpu.memory_space<vmem>>, vector<1x64x1xf32>
      tpu.vector_store %arg9[%c0_104, %c0_105, %c0_106], %126 {strides = array<i32>} : memref<1x64x1xf32, #tpu.memory_space<vmem>>, vector<1x64x1xf32>,
    } else {
    }
    return
  }
  func.func @transform_0(%arg0: i32, %arg1: i32) -> (i32, i32, i32) {
    %c0_i32 = arith.constant 0 : i32
    %c0_i32_0 = arith.constant 0 : i32
    return %arg0, %c0_i32, %arg1 : i32, i32, i32
  }
  func.func @transform_1(%arg0: i32, %arg1: i32) -> (i32, i32) {
    %c0_i32 = arith.constant 0 : i32
    %c0_i32_0 = arith.constant 0 : i32
    %c0_i32_1 = arith.constant 0 : i32
    return %c0_i32, %c0_i32_0 : i32, i32
  }
  func.func @transform_2(%arg0: i32, %arg1: i32) -> (i32, i32) {
    %c0_i32 = arith.constant 0 : i32
    %c0_i32_0 = arith.constant 0 : i32
    %c0_i32_1 = arith.constant 0 : i32
    return %c0_i32, %c0_i32_0 : i32, i32
  }
  func.func @transform_3(%arg0: i32, %arg1: i32) -> (i32, i32) {
    %c0_i32 = arith.constant 0 : i32
    %c0_i32_0 = arith.constant 0 : i32
    %c0_i32_1 = arith.constant 0 : i32
    return %c0_i32, %c0_i32_0 : i32, i32
  }
  func.func @transform_4(%arg0: i32, %arg1: i32) -> (i32, i32) {
    %c0_i32 = arith.constant 0 : i32
    %c0_i32_0 = arith.constant 0 : i32
    %c0_i32_1 = arith.constant 0 : i32
    return %c0_i32, %c0_i32_0 : i32, i32
  }
  func.func @transform_5(%arg0: i32, %arg1: i32) -> (i32, i32) {
    %c0_i32 = arith.constant 0 : i32
    %c0_i32_0 = arith.constant 0 : i32
    %c0_i32_1 = arith.constant 0 : i32
    return %c0_i32, %c0_i32_0 : i32, i32
  }
  func.func @transform_6(%arg0: i32, %arg1: i32) -> (i32, i32) {
    %c0_i32 = arith.constant 0 : i32
    %c0_i32_0 = arith.constant 0 : i32
    %c0_i32_1 = arith.constant 0 : i32
    return %c0_i32, %c0_i32_0 : i32, i32
  }
  func.func @transform_7(%arg0: i32, %arg1: i32) -> (i32, i32, i32) {
    %c0_i32 = arith.constant 0 : i32
    %c0_i32_0 = arith.constant 0 : i32
    %c0_i32_1 = arith.constant 0 : i32
    return %arg0, %c0_i32, %c0_i32_0 : i32, i32, i32
  }
}

</mosaic_0001>

<llo_original>
// kernel: tpu_custom_call.1
$region0: #{tpu_custom_call.1}
  #allocation0 [shape = 'u32[]', space=smem, size = 0x4, offset = 0x4, fixed_abs, tag = 'smem constant byte address 0x4 - core index']
  #allocation1 [shape = 'u32[144,128]{1,0:T(1,128)}', space=vmem, size = 0x12000, scoped, tag = 'internal scratch']
  #allocation2 [shape = 'f32[32,128]{1,0:T(8,128)}', space=vmem, size = 0x4000, scoped, tag = 'scratch operand']
  #allocation3 [shape = 'f32[32,128]{1,0:T(8,128)}', space=vmem, size = 0x4000, scoped, tag = 'scratch operand']
  #allocation4 [shape = 'f32[32,128]{1,0:T(8,128)}', space=vmem, size = 0x4000, scoped, tag = 'scratch operand']
  #allocation5 [shape = 'f32[32,128]{1,0:T(8,128)}', space=vmem, size = 0x4000, scoped, tag = 'scratch operand']
  %s0 = inlined_call_operand.hbm [shape: f32[2,32,1024], index: 0, kind: input, shape index: {}]
  %s1 = inlined_call_operand.vmem [shape: f32[32,32], index: 1, kind: input, shape index: {}]
  %s2 = inlined_call_operand.vmem [shape: f32[32,1], index: 2, kind: input, shape index: {}]
  %s3 = inlined_call_operand.vmem [shape: f32[32,32], index: 3, kind: input, shape index: {}]
  %s4 = inlined_call_operand.vmem [shape: f32[32,1], index: 4, kind: input, shape index: {}]
  %s5 = inlined_call_operand.vmem [shape: f32[2,32], index: 5, kind: input, shape index: {}]
  %s6 = inlined_call_operand.vmem [shape: f32[32,2], index: 6, kind: input, shape index: {}]
  %s7 = inlined_call_operand.vmem [shape: f32[2,64,1], index: 7, kind: output, shape index: {}]
  %s8 = sld [smem:[#allocation0]]
  $region73: #{tpu_custom_call.1} parent=0
    _
  %s10 = ssub.s32 1, %s8
  %s11 = scalar_select 0, %s10, %s8
  $region1: #{tpu_custom_call.1} parent=0
    #allocation6 [shape = 'u8[131072]{0}', space=vmem, size = 0x20000, scoped, tag = 'input window, operand 0']
    #allocation7 [shape = 's32[2]{0}', space=sflag, size = 0x8, scoped, tag = 'scoped memory for tpu_custom_call.1']
    %12 = vsyncpa [#allocation7], 0
    %s13 = scalar_lea.sflag [#allocation7], 1
    %14 = vsyncpa %s13, 0
    loop: start=0, step=1, limit=6
    $region2: #{tpu_custom_call.1} parent=1 // loop_pre_header
      _
    $region3: #{tpu_custom_call.1} parent=1 // loop_header
      %s16 = sphi 0, %s20
      %p17 = scmp.ge.s32.totalorder %s16, 6
      %s23 = sphi 0, %s35
      %s24 = sphi 0, %s31
      %s25 = sphi 0, %s23
      %s26 = sphi 0, %s24
      %s27 = sphi 0, %s25
      %s28 = sphi 0, %s26
      %s40 = sphi 0, %s42
      %s43 = sphi 0, %s40
      %s44 = sphi 0, %s43
      %s60 = sphi 0, %s44
      %s64 = sphi 0, %s64
      %s66 = sphi 0, %s64
      %s67 = sphi 0, %s66
      %s81 = sphi 0, %s67
      %s85 = sphi 0, %s85
      %s87 = sphi 0, %s85
      %s88 = sphi 0, %s87
      %s102 = sphi 0, %s88
      %s106 = sphi 0, %s106
      %s108 = sphi 0, %s106
      %s109 = sphi 0, %s108
      %s123 = sphi 0, %s109
      %s127 = sphi 0, %s127
      %s129 = sphi 0, %s127
      %s130 = sphi 0, %s129
      %s144 = sphi 0, %s130
      %s148 = sphi 0, %s148
      %s150 = sphi 0, %s148
      %s151 = sphi 0, %s150
      %s165 = sphi 0, %s151
      %s169 = sphi 0, %s169
      %s171 = sphi 0, %s169
      %s172 = sphi 0, %s171
      %s186 = sphi 0, %s172
      %s192 = sphi 0, %s194
      %s195 = sphi 0, %s192
      %s196 = sphi 0, %s195
      %s212 = sphi 0, %s196
    $region4: #{tpu_custom_call.1} parent=1 // loop_header_branch
      %19 = sbr.rel (%p17) target = $region8
    $region5: #{tpu_custom_call.1} parent=1 // loop_body
      %s21 = ssub.s32 %s16, 1
      %s22 = ssub.s32 %s16, 2
      %s29 = sadd.s32 1, %s24
      %p30 = scmp.ge.s32.totalorder %s29, 2
      %s31 = scalar_select %p30, 0, %s29
      %s32 = sadd.s32 1, %s23
      %s33 = scalar_select %p30, %s32, %s23
      %p34 = scmp.ge.s32.totalorder %s33, 2
      %s35 = scalar_select %p34, 0, %s33
      %s36 = ssub.s32 %s23, %s35
      %s37 = ssub.s32 %s24, %s31
      %s38 = sor.u32 %s36, %s37
      %p39 = scmp.eq.s32.totalorder %s38, 0
      %s41 = sadd.s32 %s40, 1
      %s42 = scalar_select %p39, %s40, %s41
      %p45 = pneg %p39
      %p46 = scmp.eq.s32.totalorder %s16, 3
      %p47 = por %p45, %p46
      %p48 = scmp.ne.s32.totalorder %s40, %s43
      %p49 = scmp.eq.s32.totalorder %s16, 0
      %p50 = por %p48, %p49
      %p51 = scmp.ne.s32.totalorder %s40, %s43
      %p52 = scmp.eq.s32.totalorder %s21, 3
      %p53 = por %p51, %p52
      %p54 = scmp.ne.s32.totalorder %s43, %s44
      %p55 = scmp.eq.s32.totalorder %s21, 0
      %p56 = por %p54, %p55
      %p57 = scmp.ne.s32.totalorder %s43, %s44
      %p58 = scmp.eq.s32.totalorder %s22, 3
      %p59 = por %p57, %p58
      %p61 = scmp.ne.s32.totalorder %s44, %s60
      %p62 = scmp.eq.s32.totalorder %s22, 0
      %p63 = por %p61, %p62
      %s65 = sadd.s32 %s64, 1
      %p68 = scmp.eq.s32.totalorder %s16, 3
      %p69 = scmp.ne.s32.totalorder %s64, %s66
      %p70 = scmp.eq.s32.totalorder %s16, 0
      %p71 = por %p69, %p70
      %p72 = scmp.ne.s32.totalorder %s64, %s66
      %p73 = scmp.eq.s32.totalorder %s21, 3
      %p74 = por %p72, %p73
      %p75 = scmp.ne.s32.totalorder %s66, %s67
      %p76 = scmp.eq.s32.totalorder %s21, 0
      %p77 = por %p75, %p76
      %p78 = scmp.ne.s32.totalorder %s66, %s67
      %p79 = scmp.eq.s32.totalorder %s22, 3
      %p80 = por %p78, %p79
      %p82 = scmp.ne.s32.totalorder %s67, %s81
      %p83 = scmp.eq.s32.totalorder %s22, 0
      %p84 = por %p82, %p83
      %s86 = sadd.s32 %s85, 1
      %p89 = scmp.eq.s32.totalorder %s16, 3
      %p90 = scmp.ne.s32.totalorder %s85, %s87
      %p91 = scmp.eq.s32.totalorder %s16, 0
      %p92 = por %p90, %p91
      %p93 = scmp.ne.s32.totalorder %s85, %s87
      %p94 = scmp.eq.s32.totalorder %s21, 3
      %p95 = por %p93, %p94
      %p96 = scmp.ne.s32.totalorder %s87, %s88
      %p97 = scmp.eq.s32.totalorder %s21, 0
      %p98 = por %p96, %p97
      %p99 = scmp.ne.s32.totalorder %s87, %s88
      %p100 = scmp.eq.s32.totalorder %s22, 3
      %p101 = por %p99, %p100
      %p103 = scmp.ne.s32.totalorder %s88, %s102
      %p104 = scmp.eq.s32.totalorder %s22, 0
      %p105 = por %p103, %p104
      %s107 = sadd.s32 %s106, 1
      %p110 = scmp.eq.s32.totalorder %s16, 3
      %p111 = scmp.ne.s32.totalorder %s106, %s108
      %p112 = scmp.eq.s32.totalorder %s16, 0
      %p113 = por %p111, %p112
      %p114 = scmp.ne.s32.totalorder %s106, %s108
      %p115 = scmp.eq.s32.totalorder %s21, 3
      %p116 = por %p114, %p115
      %p117 = scmp.ne.s32.totalorder %s108, %s109
      %p118 = scmp.eq.s32.totalorder %s21, 0
      %p119 = por %p117, %p118
      %p120 = scmp.ne.s32.totalorder %s108, %s109
      %p121 = scmp.eq.s32.totalorder %s22, 3
      %p122 = por %p120, %p121
      %p124 = scmp.ne.s32.totalorder %s109, %s123
      %p125 = scmp.eq.s32.totalorder %s22, 0
      %p126 = por %p124, %p125
      %s128 = sadd.s32 %s127, 1
      %p131 = scmp.eq.s32.totalorder %s16, 3
      %p132 = scmp.ne.s32.totalorder %s127, %s129
      %p133 = scmp.eq.s32.totalorder %s16, 0
      %p134 = por %p132, %p133
      %p135 = scmp.ne.s32.totalorder %s127, %s129
      %p136 = scmp.eq.s32.totalorder %s21, 3
      %p137 = por %p135, %p136
      %p138 = scmp.ne.s32.totalorder %s129, %s130
      %p139 = scmp.eq.s32.totalorder %s21, 0
      %p140 = por %p138, %p139
      %p141 = scmp.ne.s32.totalorder %s129, %s130
      %p142 = scmp.eq.s32.totalorder %s22, 3
      %p143 = por %p141, %p142
      %p145 = scmp.ne.s32.totalorder %s130, %s144
      %p146 = scmp.eq.s32.totalorder %s22, 0
      %p147 = por %p145, %p146
      %s149 = sadd.s32 %s148, 1
      %p152 = scmp.eq.s32.totalorder %s16, 3
      %p153 = scmp.ne.s32.totalorder %s148, %s150
      %p154 = scmp.eq.s32.totalorder %s16, 0
      %p155 = por %p153, %p154
      %p156 = scmp.ne.s32.totalorder %s148, %s150
      %p157 = scmp.eq.s32.totalorder %s21, 3
      %p158 = por %p156, %p157
      %p159 = scmp.ne.s32.totalorder %s150, %s151
      %p160 = scmp.eq.s32.totalorder %s21, 0
      %p161 = por %p159, %p160
      %p162 = scmp.ne.s32.totalorder %s150, %s151
      %p163 = scmp.eq.s32.totalorder %s22, 3
      %p164 = por %p162, %p163
      %p166 = scmp.ne.s32.totalorder %s151, %s165
      %p167 = scmp.eq.s32.totalorder %s22, 0
      %p168 = por %p166, %p167
      %s170 = sadd.s32 %s169, 1
      %p173 = scmp.eq.s32.totalorder %s16, 3
      %p174 = scmp.ne.s32.totalorder %s169, %s171
      %p175 = scmp.eq.s32.totalorder %s16, 0
      %p176 = por %p174, %p175
      %p177 = scmp.ne.s32.totalorder %s169, %s171
      %p178 = scmp.eq.s32.totalorder %s21, 3
      %p179 = por %p177, %p178
      %p180 = scmp.ne.s32.totalorder %s171, %s172
      %p181 = scmp.eq.s32.totalorder %s21, 0
      %p182 = por %p180, %p181
      %p183 = scmp.ne.s32.totalorder %s171, %s172
      %p184 = scmp.eq.s32.totalorder %s22, 3
      %p185 = por %p183, %p184
      %p187 = scmp.ne.s32.totalorder %s172, %s186
      %p188 = scmp.eq.s32.totalorder %s22, 0
      %p189 = por %p187, %p188
      %s190 = ssub.s32 %s23, %s35
      %p191 = scmp.eq.s32.totalorder %s190, 0
      %s193 = sadd.s32 %s192, 1
      %s194 = scalar_select %p191, %s192, %s193
      %p197 = pneg %p191
      %p198 = scmp.eq.s32.totalorder %s16, 3
      %p199 = por %p197, %p198
      %p200 = scmp.ne.s32.totalorder %s192, %s195
      %p201 = scmp.eq.s32.totalorder %s16, 0
      %p202 = por %p200, %p201
      %p203 = scmp.ne.s32.totalorder %s192, %s195
      %p204 = scmp.eq.s32.totalorder %s21, 3
      %p205 = por %p203, %p204
      %p206 = scmp.ne.s32.totalorder %s195, %s196
      %p207 = scmp.eq.s32.totalorder %s21, 0
      %p208 = por %p206, %p207
      %p209 = scmp.ne.s32.totalorder %s195, %s196
      %p210 = scmp.eq.s32.totalorder %s22, 3
      %p211 = por %p209, %p210
      %p213 = scmp.ne.s32.totalorder %s196, %s212
      %p214 = scmp.eq.s32.totalorder %s22, 0
      %p215 = por %p213, %p214
      %p216 = scmp.le.s32.totalorder 1, %s16
      %p217 = scmp.lt.s32.totalorder %s16, 5
      %p218 = pnand %p216, %p217
      %p219 = pneg %p218
      // Predicated region
      $region9: #{tpu_custom_call.1} parent=5 // pred_check
        _
      $region10: #{tpu_custom_call.1} parent=5 // pred_check_branch
        %221 = sbr.rel (%p218) target = $region12
      $region11: #{tpu_custom_call.1} parent=5 // pred_region
        %s222 = ssub.s32 %s16, 1
        // Predicated region
        $region13: #{tpu_custom_call.1} parent=11 // pred_check
          %p223 = pneg %p77
        $region14: #{tpu_custom_call.1} parent=11 // pred_check_branch
          %225 = sbr.rel (%p223) target = $region16
        $region15: #{tpu_custom_call.1} parent=11 // pred_region
          _
        $region16: #{tpu_custom_call.1} parent=11 // pred_fallthru
          _
        // Predicated region
        $region17: #{tpu_custom_call.1} parent=11 // pred_check
          %p226 = pneg %p98
        $region18: #{tpu_custom_call.1} parent=11 // pred_check_branch
          %228 = sbr.rel (%p226) target = $region20
        $region19: #{tpu_custom_call.1} parent=11 // pred_region
          _
        $region20: #{tpu_custom_call.1} parent=11 // pred_fallthru
          _
        // Predicated region
        $region21: #{tpu_custom_call.1} parent=11 // pred_check
          %p229 = pneg %p119
        $region22: #{tpu_custom_call.1} parent=11 // pred_check_branch
          %231 = sbr.rel (%p229) target = $region24
        $region23: #{tpu_custom_call.1} parent=11 // pred_region
          _
        $region24: #{tpu_custom_call.1} parent=11 // pred_fallthru
          _
        // Predicated region
        $region25: #{tpu_custom_call.1} parent=11 // pred_check
          %p232 = pneg %p140
        $region26: #{tpu_custom_call.1} parent=11 // pred_check_branch
          %234 = sbr.rel (%p232) target = $region28
        $region27: #{tpu_custom_call.1} parent=11 // pred_region
          _
        $region28: #{tpu_custom_call.1} parent=11 // pred_fallthru
          _
        // Predicated region
        $region29: #{tpu_custom_call.1} parent=11 // pred_check
          %p235 = pneg %p161
        $region30: #{tpu_custom_call.1} parent=11 // pred_check_branch
          %237 = sbr.rel (%p235) target = $region32
        $region31: #{tpu_custom_call.1} parent=11 // pred_region
          _
        $region32: #{tpu_custom_call.1} parent=11 // pred_fallthru
          _
        // Predicated region
        $region33: #{tpu_custom_call.1} parent=11 // pred_check
          %p238 = pneg %p182
        $region34: #{tpu_custom_call.1} parent=11 // pred_check_branch
          %240 = sbr.rel (%p238) target = $region36
        $region35: #{tpu_custom_call.1} parent=11 // pred_region
          _
        $region36: #{tpu_custom_call.1} parent=11 // pred_fallthru
          _
      $region12: #{tpu_custom_call.1} parent=5 // pred_fallthru
        _
      %p241 = scmp.lt.s32.totalorder %s16, 4
      // Predicated region
      $region37: #{tpu_custom_call.1} parent=5 // pred_check
        %p242 = pneg %p241
      $region38: #{tpu_custom_call.1} parent=5 // pred_check_branch
        %244 = sbr.rel (%p242) target = $region40
      $region39: #{tpu_custom_call.1} parent=5 // pred_region
        // Predicated region
        $region41: #{tpu_custom_call.1} parent=39 // pred_check
          %p245 = pneg %p50
        $region42: #{tpu_custom_call.1} parent=39 // pred_check_branch
          %247 = sbr.rel (%p245) target = $region44
        $region43: #{tpu_custom_call.1} parent=39 // pred_region
          %s248 = sand.u32 %s40, 1
          %s249 = scalar_lea.sflag [#allocation7], %s248
          %s250 = sand.u32 %s40, 1
          %s251 = smul.addr %s250, 128
          %s252 = scalar_lea.vmem [#allocation6], %s251
          %s253 = smul.u32 4, %s24
          %s255 = ssub.s32 2048, 2048
          %256 = vsyncadd %s249, %s255
          %s257 = smul.addr %s23, 32
          %s258 = sadd.s32 %s253, %s257
          %s259 = smul.addr %s258, 128
          %s260 = scalar_lea.hbm %s0, %s259
          %s261 = sshll.u32 %s252, 4
          %s262 = int_to_ptr.vmem [resolvable:$true] %s261
          %267 = dma.hbm_to_vmem [thread:$0]  %s260, 2048, %s262, %s249, 1024, 512, 32
        $region44: #{tpu_custom_call.1} parent=39 // pred_fallthru
          _
      $region40: #{tpu_custom_call.1} parent=5 // pred_fallthru
        _
      %p268 = scmp.le.s32.totalorder 1, %s16
      %p269 = scmp.lt.s32.totalorder %s16, 5
      %p270 = pnand %p268, %p269
      %p271 = pneg %p270
      // Predicated region
      $region45: #{tpu_custom_call.1} parent=5 // pred_check
        _
      $region46: #{tpu_custom_call.1} parent=5 // pred_check_branch
        %273 = sbr.rel (%p270) target = $region48
      $region47: #{tpu_custom_call.1} parent=5 // pred_region
        %s274 = ssub.s32 %s16, 1
        %s275 = sand.u32 %s43, 1
        %s276 = scalar_lea.sflag [#allocation7], %s275
        %s277 = sand.u32 %s43, 1
        %s278 = smul.addr %s277, 128
        %s279 = scalar_lea.vmem [#allocation6], %s278
        // Predicated region
        $region49: #{tpu_custom_call.1} parent=47 // pred_check
          %p280 = pneg %p56
        $region50: #{tpu_custom_call.1} parent=47 // pred_check_branch
          %282 = sbr.rel (%p280) target = $region52
        $region51: #{tpu_custom_call.1} parent=47 // pred_region
          %283 = dma.done %s276, 2048
        $region52: #{tpu_custom_call.1} parent=47 // pred_fallthru
          _
        %s284 = sand.u32 %s43, 1
        %s285 = scalar_lea.sflag [#allocation7], %s284
        %s286 = sand.u32 %s43, 1
        %s287 = smul.addr %s286, 128
        %s288 = scalar_lea.vmem [#allocation6], %s287
        %p289 = pneg %p56
        %p290 = pneg %p53
        %p291 = pneg %p77
        %p292 = pneg %p74
        %p293 = pneg %p98
        %p294 = pneg %p95
        %p295 = pneg %p119
        %p296 = pneg %p116
        %p297 = pneg %p140
        %p298 = pneg %p137
        %p299 = pneg %p161
        %p300 = pneg %p158
        %p301 = pneg %p182
        %p302 = pneg %p179
        %p303 = pneg %p208
        %p304 = pneg %p205
        %p305 = scmp.lt.s32.totalorder %s25, 1
        %s306 = scalar_select %p305, %s25, 1
        %s307 = smul.addr %s306, 8
        %s308 = smul.addr %s307, 8
        %s309 = scalar_lea.vmem %s7, %s308
        %s310 = smul.u32 4, %s26
        %p311 = scmp.lt.s32.totalorder %s25, 1
        %s312 = scalar_select %p311, %s25, 1
        %s313 = smul.addr %s312, 8
        %s314 = smul.addr %s313, 8
        %s315 = scalar_lea.vmem %s7, %s314
        %p316 = scmp.eq.s32.totalorder %s26, 0
        // Predicated region
        $region53: #{tpu_custom_call.1} parent=47 // pred_check
          %p317 = pneg %p316
        $region54: #{tpu_custom_call.1} parent=47 // pred_check_branch
          %319 = sbr.rel (%p317) target = $region56
        $region55: #{tpu_custom_call.1} parent=47 // pred_region
          %320 = vst [vmem:[#allocation2] sm:$0xff] 0.0
          %321 = vst [vmem:[#allocation2 + $0x8] sm:$0xff] 0.0
          %322 = vst [vmem:[#allocation2 + $0x10] sm:$0xff] 0.0
          %323 = vst [vmem:[#allocation2 + $0x18] sm:$0xff] 0.0
          %324 = vst [vmem:[#allocation4] sm:$0xff] 0.0
          %325 = vst [vmem:[#allocation4 + $0x8] sm:$0xff] 0.0
          %326 = vst [vmem:[#allocation4 + $0x10] sm:$0xff] 0.0
          %327 = vst [vmem:[#allocation4 + $0x18] sm:$0xff] 0.0
          %328 = vst [vmem:[#allocation5] sm:$0xff] 0.0
          %329 = vst [vmem:[#allocation5 + $0x8] sm:$0xff] 0.0
          %330 = vst [vmem:[#allocation5 + $0x10] sm:$0xff] 0.0
          %331 = vst [vmem:[#allocation5 + $0x18] sm:$0xff] 0.0
          %332 = vst [vmem:[#allocation3] sm:$0xff] -inf
          %333 = vst [vmem:[#allocation3 + $0x8] sm:$0xff] -inf
          %334 = vst [vmem:[#allocation3 + $0x10] sm:$0xff] -inf
          %335 = vst [vmem:[#allocation3 + $0x18] sm:$0xff] -inf
        $region56: #{tpu_custom_call.1} parent=47 // pred_fallthru
          _
        %v336 = vld [vmem:[%s279] sm:$0xff]
        %v337 = vld [vmem:[%s279 + $0x8] sm:$0xff]
        %v338 = vld [vmem:[%s279 + $0x10] sm:$0xff]
        %v339 = vld [vmem:[%s279 + $0x18] sm:$0xff]
        %v340 = vld [vmem:[%s279 + $0x20] sm:$0xff]
        %v341 = vld [vmem:[%s279 + $0x28] sm:$0xff]
        %v342 = vld [vmem:[%s279 + $0x30] sm:$0xff]
        %v343 = vld [vmem:[%s279 + $0x38] sm:$0xff]
        %v344 = vld [vmem:[%s279 + $0x40] sm:$0xff]
        %v345 = vld [vmem:[%s279 + $0x48] sm:$0xff]
        %v346 = vld [vmem:[%s279 + $0x50] sm:$0xff]
        %v347 = vld [vmem:[%s279 + $0x58] sm:$0xff]
        %v348 = vld [vmem:[%s279 + $0x60] sm:$0xff]
        %v349 = vld [vmem:[%s279 + $0x68] sm:$0xff]
        %v350 = vld [vmem:[%s279 + $0x70] sm:$0xff]
        %v351 = vld [vmem:[%s279 + $0x78] sm:$0xff]
        %v352 = vld [vmem:[%s1] sm:$0xff]
        %v353 = vld [vmem:[%s1 + $0x8] sm:$0xff]
        %v354 = vld [vmem:[%s1 + $0x10] sm:$0xff]
        %v355 = vld [vmem:[%s1 + $0x18] sm:$0xff]
        %v356 = vld [vmem:[%s3] sm:$0xff]
        %v357 = vld [vmem:[%s3 + $0x8] sm:$0xff]
        %v358 = vld [vmem:[%s3 + $0x10] sm:$0xff]
        %v359 = vld [vmem:[%s3 + $0x18] sm:$0xff]
        %v360 = vld [vmem:[%s2] sm:$0xff]
        %v361 = vld [vmem:[%s2 + $0x8] sm:$0xff]
        %v362 = vld [vmem:[%s2 + $0x10] sm:$0xff]
        %v363 = vld [vmem:[%s2 + $0x18] sm:$0xff]
        %v364 = vld [vmem:[%s4] sm:$0xff]
        %v365 = vld [vmem:[%s4 + $0x8] sm:$0xff]
        %v366 = vld [vmem:[%s4 + $0x10] sm:$0xff]
        %v367 = vld [vmem:[%s4 + $0x18] sm:$0xff]
        %369 = vset.pattern.permute.xlu0 0
        %370 = vperm.xlu0 %369, %v360
        %v371 = vpop.permute.xlu0 %370
        %374 = vset.pattern.permute.xlu0 0
        %375 = vperm.xlu0 %374, %v361
        %v376 = vpop.permute.xlu0 %375
        %379 = vset.pattern.permute.xlu0 0
        %380 = vperm.xlu0 %379, %v362
        %v381 = vpop.permute.xlu0 %380
        %384 = vset.pattern.permute.xlu0 0
        %385 = vperm.xlu0 %384, %v363
        %v386 = vpop.permute.xlu0 %385
        %vm388 = vcmask 261120
        %v390 = vsel %vm388, %v352, 0
        %v393 = vsel %vm388, %v353, 0
        %v396 = vsel %vm388, %v354, 0
        %v399 = vsel %vm388, %v355, 0
        %401 = vmatprep.subr.mxu0 %v337
        %402 = vmatpush1.msra.mxu0 %v336
        %403 = vmatprep.subr.mxu0 %v341
        %404 = vmatpush1.msra.mxu0 %v340
        %405 = vmatprep.subr.mxu0 %v345
        %406 = vmatpush1.msra.mxu0 %v344
        %407 = vmatprep.subr.mxu0 %v349
        %408 = vmatpush1.msra.mxu0 %v348
        %409 = vmatprep.subr.mxu0 0.0
        %410 = vmatpush1.msra.mxu0 0.0
        %411 = vmatprep.subr.mxu0 0.0
        %412 = vmatpush1.msra.mxu0 0.0
        %413 = vmatprep.subr.mxu0 0.0
        %414 = vmatpush1.msra.mxu0 0.0
        %415 = vmatprep.subr.mxu0 0.0
        %416 = vmatpush1.msra.mxu0 0.0
        %417 = vmatprep.subr.mxu0 0.0
        %418 = vmatpush1.msra.mxu0 0.0
        %419 = vmatprep.subr.mxu0 0.0
        %420 = vmatpush1.msra.mxu0 0.0
        %421 = vmatprep.subr.mxu0 0.0
        %422 = vmatpush1.msra.mxu0 0.0
        %423 = vmatprep.subr.mxu0 0.0
        %424 = vmatpush1.msra.mxu0 0.0
        %425 = vmatprep.subr.mxu0 0.0
        %426 = vmatpush1.msra.mxu0 0.0
        %427 = vmatprep.subr.mxu0 0.0
        %428 = vmatpush1.msra.mxu0 0.0
        %429 = vmatprep.subr.mxu0 0.0
        %430 = vmatpush1.msra.mxu0 0.0
        %431 = vmatprep.subr.mxu0 0.0
        %432 = vmatpush1.msra.mxu0 0.0
        %433 = vmatprep.subr.mxu0 0.0
        %434 = vmatpush1.msra.mxu0 0.0
        %435 = vmatprep.subr.mxu0 0.0
        %436 = vmatpush1.msra.mxu0 0.0
        %437 = vmatprep.subr.mxu0 0.0
        %438 = vmatpush1.msra.mxu0 0.0
        %439 = vmatprep.subr.mxu0 0.0
        %440 = vmatpush1.msra.mxu0 0.0
        %441 = vmatprep.subr.mxu0 0.0
        %442 = vmatpush1.msra.mxu0 0.0
        %443 = vmatprep.subr.mxu0 0.0
        %444 = vmatpush1.msra.mxu0 0.0
        %445 = vmatprep.subr.mxu0 0.0
        %446 = vmatpush1.msra.mxu0 0.0
        %447 = vmatprep.subr.mxu0 0.0
        %448 = vmatpush1.msra.mxu0 0.0
        %449 = vmatprep.subr.mxu0 0.0
        %450 = vmatpush1.msra.mxu0 0.0
        %451 = vmatprep.subr.mxu0 0.0
        %452 = vmatpush1.msra.mxu0 0.0
        %453 = vmatprep.subr.mxu0 0.0
        %454 = vmatpush1.msra.mxu0 0.0
        %455 = vmatprep.subr.mxu0 0.0
        %456 = vmatpush1.msra.mxu0 0.0
        %457 = vmatprep.subr.mxu0 0.0
        %458 = vmatpush1.msra.mxu0 0.0
        %459 = vmatprep.subr.mxu0 0.0
        %460 = vmatpush1.msra.mxu0 0.0
        %461 = vmatprep.subr.mxu0 0.0
        %462 = vmatpush1.msra.mxu0 0.0
        %463 = vmatprep.subr.mxu0 0.0
        %464 = vmatpush1.msra.mxu0 0.0
        %465 = vmatprep.mubr.f32.mxu0 0.0
        %466 = vmatmul.mubr.f32.gmra.mrb[0].mxu0 %v390
        %v467 = vpop.f32.mrb[0].mxu0
        %v468 = vadd.f32 %v371, %v467
        %v469 = vpop.f32.mrb[0].mxu0
        %v470 = vadd.f32 %v371, %v469
        %471 = vmatprep.mubr.f32.mxu0 0.0
        %472 = vmatmul.mubr.f32.gmra.mrb[0].mxu0 %v393
        %v473 = vpop.f32.mrb[0].mxu0
        %v474 = vadd.f32 %v376, %v473
        %v475 = vpop.f32.mrb[0].mxu0
        %v476 = vadd.f32 %v376, %v475
        %477 = vmatprep.mubr.f32.mxu0 0.0
        %478 = vmatmul.mubr.f32.gmra.mrb[0].mxu0 %v396
        %v479 = vpop.f32.mrb[0].mxu0
        %v480 = vadd.f32 %v381, %v479
        %v481 = vpop.f32.mrb[0].mxu0
        %v482 = vadd.f32 %v381, %v481
        %483 = vmatprep.mubr.f32.mxu0 0.0
        %484 = vmatmul.mubr.f32.gmra.mrb[0].mxu0 %v399
        %v485 = vpop.f32.mrb[0].mxu0
        %v486 = vadd.f32 %v386, %v485
        %v487 = vpop.f32.mrb[0].mxu0
        %v488 = vadd.f32 %v386, %v487
        %489 = vdwg.mxu0
        %490 = vmatprep.subr.mxu0 %v339
        %491 = vmatpush1.msra.mxu0 %v338
        %492 = vmatprep.subr.mxu0 %v343
        %493 = vmatpush1.msra.mxu0 %v342
        %494 = vmatprep.subr.mxu0 %v347
        %495 = vmatpush1.msra.mxu0 %v346
        %496 = vmatprep.subr.mxu0 %v351
        %497 = vmatpush1.msra.mxu0 %v350
        %498 = vmatprep.subr.mxu0 0.0
        %499 = vmatpush1.msra.mxu0 0.0
        %500 = vmatprep.subr.mxu0 0.0
        %501 = vmatpush1.msra.mxu0 0.0
        %502 = vmatprep.subr.mxu0 0.0
        %503 = vmatpush1.msra.mxu0 0.0
        %504 = vmatprep.subr.mxu0 0.0
        %505 = vmatpush1.msra.mxu0 0.0
        %506 = vmatprep.subr.mxu0 0.0
        %507 = vmatpush1.msra.mxu0 0.0
        %508 = vmatprep.subr.mxu0 0.0
        %509 = vmatpush1.msra.mxu0 0.0
        %510 = vmatprep.subr.mxu0 0.0
        %511 = vmatpush1.msra.mxu0 0.0
        %512 = vmatprep.subr.mxu0 0.0
        %513 = vmatpush1.msra.mxu0 0.0
        %514 = vmatprep.subr.mxu0 0.0
        %515 = vmatpush1.msra.mxu0 0.0
        %516 = vmatprep.subr.mxu0 0.0
        %517 = vmatpush1.msra.mxu0 0.0
        %518 = vmatprep.subr.mxu0 0.0
        %519 = vmatpush1.msra.mxu0 0.0
        %520 = vmatprep.subr.mxu0 0.0
        %521 = vmatpush1.msra.mxu0 0.0
        %522 = vmatprep.subr.mxu0 0.0
        %523 = vmatpush1.msra.mxu0 0.0
        %524 = vmatprep.subr.mxu0 0.0
        %525 = vmatpush1.msra.mxu0 0.0
        %526 = vmatprep.subr.mxu0 0.0
        %527 = vmatpush1.msra.mxu0 0.0
        %528 = vmatprep.subr.mxu0 0.0
        %529 = vmatpush1.msra.mxu0 0.0
        %530 = vmatprep.subr.mxu0 0.0
        %531 = vmatpush1.msra.mxu0 0.0
        %532 = vmatprep.subr.mxu0 0.0
        %533 = vmatpush1.msra.mxu0 0.0
        %534 = vmatprep.subr.mxu0 0.0
        %535 = vmatpush1.msra.mxu0 0.0
        %536 = vmatprep.subr.mxu0 0.0
        %537 = vmatpush1.msra.mxu0 0.0
        %538 = vmatprep.subr.mxu0 0.0
        %539 = vmatpush1.msra.mxu0 0.0
        %540 = vmatprep.subr.mxu0 0.0
        %541 = vmatpush1.msra.mxu0 0.0
        %542 = vmatprep.subr.mxu0 0.0
        %543 = vmatpush1.msra.mxu0 0.0
        %544 = vmatprep.subr.mxu0 0.0
        %545 = vmatpush1.msra.mxu0 0.0
        %546 = vmatprep.subr.mxu0 0.0
        %547 = vmatpush1.msra.mxu0 0.0
        %548 = vmatprep.subr.mxu0 0.0
        %549 = vmatpush1.msra.mxu0 0.0
        %550 = vmatprep.subr.mxu0 0.0
        %551 = vmatpush1.msra.mxu0 0.0
        %552 = vmatprep.subr.mxu0 0.0
        %553 = vmatpush1.msra.mxu0 0.0
        %554 = vmatprep.mubr.f32.mxu0 0.0
        %555 = vmatmul.mubr.f32.gmra.mrb[0].mxu0 %v390
        %v556 = vpop.f32.mrb[0].mxu0
        %v557 = vadd.f32 %v371, %v556
        %v558 = vpop.f32.mrb[0].mxu0
        %v559 = vadd.f32 %v371, %v558
        %560 = vmatprep.mubr.f32.mxu0 0.0
        %561 = vmatmul.mubr.f32.gmra.mrb[0].mxu0 %v393
        %v562 = vpop.f32.mrb[0].mxu0
        %v563 = vadd.f32 %v376, %v562
        %v564 = vpop.f32.mrb[0].mxu0
        %v565 = vadd.f32 %v376, %v564
        %566 = vmatprep.mubr.f32.mxu0 0.0
        %567 = vmatmul.mubr.f32.gmra.mrb[0].mxu0 %v396
        %v568 = vpop.f32.mrb[0].mxu0
        %v569 = vadd.f32 %v381, %v568
        %v570 = vpop.f32.mrb[0].mxu0
        %v571 = vadd.f32 %v381, %v570
        %572 = vmatprep.mubr.f32.mxu0 0.0
        %573 = vmatmul.mubr.f32.gmra.mrb[0].mxu0 %v399
        %v574 = vpop.f32.mrb[0].mxu0
        %v575 = vadd.f32 %v386, %v574
        %v576 = vpop.f32.mrb[0].mxu0
        %v577 = vadd.f32 %v386, %v576
        %578 = vdwg.mxu0
        %v579 = vmax.f32 %v468, 0.0
        %v580 = vmax.f32 %v470, 0.0
        %v581 = vmax.f32 %v557, 0.0
        %v582 = vmax.f32 %v559, 0.0
        %v583 = vmax.f32 %v474, 0.0
        %v584 = vmax.f32 %v476, 0.0
        %v585 = vmax.f32 %v563, 0.0
        %v586 = vmax.f32 %v565, 0.0
        %v587 = vmax.f32 %v480, 0.0
        %v588 = vmax.f32 %v482, 0.0
        %v589 = vmax.f32 %v569, 0.0
        %v590 = vmax.f32 %v571, 0.0
        %v591 = vmax.f32 %v486, 0.0
        %v592 = vmax.f32 %v488, 0.0
        %v593 = vmax.f32 %v575, 0.0
        %v594 = vmax.f32 %v577, 0.0
        %596 = vset.pattern.permute.xlu0 0
        %597 = vperm.xlu0 %596, %v364
        %v598 = vpop.permute.xlu0 %597
        %601 = vset.pattern.permute.xlu0 0
        %602 = vperm.xlu0 %601, %v365
        %v603 = vpop.permute.xlu0 %602
        %606 = vset.pattern.permute.xlu0 0
        %607 = vperm.xlu0 %606, %v366
        %v608 = vpop.permute.xlu0 %607
        %611 = vset.pattern.permute.xlu0 0
        %612 = vperm.xlu0 %611, %v367
        %v613 = vpop.permute.xlu0 %612
        %v616 = vsel %vm388, %v356, 0
        %v619 = vsel %vm388, %v357, 0
        %v622 = vsel %vm388, %v358, 0
        %v625 = vsel %vm388, %v359, 0
        %627 = vmatprep.subr.mxu0 %v580
        %628 = vmatpush1.msra.mxu0 %v579
        %629 = vmatprep.subr.mxu0 %v584
        %630 = vmatpush1.msra.mxu0 %v583
        %631 = vmatprep.subr.mxu0 %v588
        %632 = vmatpush1.msra.mxu0 %v587
        %633 = vmatprep.subr.mxu0 %v592
        %634 = vmatpush1.msra.mxu0 %v591
        %635 = vmatprep.subr.mxu0 0.0
        %636 = vmatpush1.msra.mxu0 0.0
        %637 = vmatprep.subr.mxu0 0.0
        %638 = vmatpush1.msra.mxu0 0.0
        %639 = vmatprep.subr.mxu0 0.0
        %640 = vmatpush1.msra.mxu0 0.0
        %641 = vmatprep.subr.mxu0 0.0
        %642 = vmatpush1.msra.mxu0 0.0
        %643 = vmatprep.subr.mxu0 0.0
        %644 = vmatpush1.msra.mxu0 0.0
        %645 = vmatprep.subr.mxu0 0.0
        %646 = vmatpush1.msra.mxu0 0.0
        %647 = vmatprep.subr.mxu0 0.0
        %648 = vmatpush1.msra.mxu0 0.0
        %649 = vmatprep.subr.mxu0 0.0
        %650 = vmatpush1.msra.mxu0 0.0
        %651 = vmatprep.subr.mxu0 0.0
        %652 = vmatpush1.msra.mxu0 0.0
        %653 = vmatprep.subr.mxu0 0.0
        %654 = vmatpush1.msra.mxu0 0.0
        %655 = vmatprep.subr.mxu0 0.0
        %656 = vmatpush1.msra.mxu0 0.0
        %657 = vmatprep.subr.mxu0 0.0
        %658 = vmatpush1.msra.mxu0 0.0
        %659 = vmatprep.subr.mxu0 0.0
        %660 = vmatpush1.msra.mxu0 0.0
        %661 = vmatprep.subr.mxu0 0.0
        %662 = vmatpush1.msra.mxu0 0.0
        %663 = vmatprep.subr.mxu0 0.0
        %664 = vmatpush1.msra.mxu0 0.0
        %665 = vmatprep.subr.mxu0 0.0
        %666 = vmatpush1.msra.mxu0 0.0
        %667 = vmatprep.subr.mxu0 0.0
        %668 = vmatpush1.msra.mxu0 0.0
        %669 = vmatprep.subr.mxu0 0.0
        %670 = vmatpush1.msra.mxu0 0.0
        %671 = vmatprep.subr.mxu0 0.0
        %672 = vmatpush1.msra.mxu0 0.0
        %673 = vmatprep.subr.mxu0 0.0
        %674 = vmatpush1.msra.mxu0 0.0
        %675 = vmatprep.subr.mxu0 0.0
        %676 = vmatpush1.msra.mxu0 0.0
        %677 = vmatprep.subr.mxu0 0.0
        %678 = vmatpush1.msra.mxu0 0.0
        %679 = vmatprep.subr.mxu0 0.0
        %680 = vmatpush1.msra.mxu0 0.0
        %681 = vmatprep.subr.mxu0 0.0
        %682 = vmatpush1.msra.mxu0 0.0
        %683 = vmatprep.subr.mxu0 0.0
        %684 = vmatpush1.msra.mxu0 0.0
        %685 = vmatprep.subr.mxu0 0.0
        %686 = vmatpush1.msra.mxu0 0.0
        %687 = vmatprep.subr.mxu0 0.0
        %688 = vmatpush1.msra.mxu0 0.0
        %689 = vmatprep.subr.mxu0 0.0
        %690 = vmatpush1.msra.mxu0 0.0
        %691 = vmatprep.mubr.f32.mxu0 0.0
        %692 = vmatmul.mubr.f32.gmra.mrb[0].mxu0 %v616
        %v693 = vpop.f32.mrb[0].mxu0
        %v694 = vadd.f32 %v598, %v693
        %v695 = vpop.f32.mrb[0].mxu0
        %v696 = vadd.f32 %v598, %v695
        %697 = vmatprep.mubr.f32.mxu0 0.0
        %698 = vmatmul.mubr.f32.gmra.mrb[0].mxu0 %v619
        %v699 = vpop.f32.mrb[0].mxu0
        %v700 = vadd.f32 %v603, %v699
        %v701 = vpop.f32.mrb[0].mxu0
        %v702 = vadd.f32 %v603, %v701
        %703 = vmatprep.mubr.f32.mxu0 0.0
        %704 = vmatmul.mubr.f32.gmra.mrb[0].mxu0 %v622
        %v705 = vpop.f32.mrb[0].mxu0
        %v706 = vadd.f32 %v608, %v705
        %v707 = vpop.f32.mrb[0].mxu0
        %v708 = vadd.f32 %v608, %v707
        %709 = vmatprep.mubr.f32.mxu0 0.0
        %710 = vmatmul.mubr.f32.gmra.mrb[0].mxu0 %v625
        %v711 = vpop.f32.mrb[0].mxu0
        %v712 = vadd.f32 %v613, %v711
        %v713 = vpop.f32.mrb[0].mxu0
        %v714 = vadd.f32 %v613, %v713
        %715 = vdwg.mxu0
        %716 = vmatprep.subr.mxu0 %v582
        %717 = vmatpush1.msra.mxu0 %v581
        %718 = vmatprep.subr.mxu0 %v586
        %719 = vmatpush1.msra.mxu0 %v585
        %720 = vmatprep.subr.mxu0 %v590
        %721 = vmatpush1.msra.mxu0 %v589
        %722 = vmatprep.subr.mxu0 %v594
        %723 = vmatpush1.msra.mxu0 %v593
        %724 = vmatprep.subr.mxu0 0.0
        %725 = vmatpush1.msra.mxu0 0.0
        %726 = vmatprep.subr.mxu0 0.0
        %727 = vmatpush1.msra.mxu0 0.0
        %728 = vmatprep.subr.mxu0 0.0
        %729 = vmatpush1.msra.mxu0 0.0
        %730 = vmatprep.subr.mxu0 0.0
        %731 = vmatpush1.msra.mxu0 0.0
        %732 = vmatprep.subr.mxu0 0.0
        %733 = vmatpush1.msra.mxu0 0.0
        %734 = vmatprep.subr.mxu0 0.0
        %735 = vmatpush1.msra.mxu0 0.0
        %736 = vmatprep.subr.mxu0 0.0
        %737 = vmatpush1.msra.mxu0 0.0
        %738 = vmatprep.subr.mxu0 0.0
        %739 = vmatpush1.msra.mxu0 0.0
        %740 = vmatprep.subr.mxu0 0.0
        %741 = vmatpush1.msra.mxu0 0.0
        %742 = vmatprep.subr.mxu0 0.0
        %743 = vmatpush1.msra.mxu0 0.0
        %744 = vmatprep.subr.mxu0 0.0
        %745 = vmatpush1.msra.mxu0 0.0
        %746 = vmatprep.subr.mxu0 0.0
        %747 = vmatpush1.msra.mxu0 0.0
        %748 = vmatprep.subr.mxu0 0.0
        %749 = vmatpush1.msra.mxu0 0.0
        %750 = vmatprep.subr.mxu0 0.0
        %751 = vmatpush1.msra.mxu0 0.0
        %752 = vmatprep.subr.mxu0 0.0
        %753 = vmatpush1.msra.mxu0 0.0
        %754 = vmatprep.subr.mxu0 0.0
        %755 = vmatpush1.msra.mxu0 0.0
        %756 = vmatprep.subr.mxu0 0.0
        %757 = vmatpush1.msra.mxu0 0.0
        %758 = vmatprep.subr.mxu0 0.0
        %759 = vmatpush1.msra.mxu0 0.0
        %760 = vmatprep.subr.mxu0 0.0
        %761 = vmatpush1.msra.mxu0 0.0
        %762 = vmatprep.subr.mxu0 0.0
        %763 = vmatpush1.msra.mxu0 0.0
        %764 = vmatprep.subr.mxu0 0.0
        %765 = vmatpush1.msra.mxu0 0.0
        %766 = vmatprep.subr.mxu0 0.0
        %767 = vmatpush1.msra.mxu0 0.0
        %768 = vmatprep.subr.mxu0 0.0
        %769 = vmatpush1.msra.mxu0 0.0
        %770 = vmatprep.subr.mxu0 0.0
        %771 = vmatpush1.msra.mxu0 0.0
        %772 = vmatprep.subr.mxu0 0.0
        %773 = vmatpush1.msra.mxu0 0.0
        %774 = vmatprep.subr.mxu0 0.0
        %775 = vmatpush1.msra.mxu0 0.0
        %776 = vmatprep.subr.mxu0 0.0
        %777 = vmatpush1.msra.mxu0 0.0
        %778 = vmatprep.subr.mxu0 0.0
        %779 = vmatpush1.msra.mxu0 0.0
        %780 = vmatprep.mubr.f32.mxu0 0.0
        %781 = vmatmul.mubr.f32.gmra.mrb[0].mxu0 %v616
        %v782 = vpop.f32.mrb[0].mxu0
        %v783 = vadd.f32 %v598, %v782
        %v784 = vpop.f32.mrb[0].mxu0
        %v785 = vadd.f32 %v598, %v784
        %786 = vmatprep.mubr.f32.mxu0 0.0
        %787 = vmatmul.mubr.f32.gmra.mrb[0].mxu0 %v619
        %v788 = vpop.f32.mrb[0].mxu0
        %v789 = vadd.f32 %v603, %v788
        %v790 = vpop.f32.mrb[0].mxu0
        %v791 = vadd.f32 %v603, %v790
        %792 = vmatprep.mubr.f32.mxu0 0.0
        %793 = vmatmul.mubr.f32.gmra.mrb[0].mxu0 %v622
        %v794 = vpop.f32.mrb[0].mxu0
        %v795 = vadd.f32 %v608, %v794
        %v796 = vpop.f32.mrb[0].mxu0
        %v797 = vadd.f32 %v608, %v796
        %798 = vmatprep.mubr.f32.mxu0 0.0
        %799 = vmatmul.mubr.f32.gmra.mrb[0].mxu0 %v625
        %v800 = vpop.f32.mrb[0].mxu0
        %v801 = vadd.f32 %v613, %v800
        %v802 = vpop.f32.mrb[0].mxu0
        %v803 = vadd.f32 %v613, %v802
        %804 = vdwg.mxu0
        %v805 = vmul.f32 %v694, %v336
        %v806 = vmul.f32 %v696, %v337
        %v807 = vmul.f32 %v783, %v338
        %v808 = vmul.f32 %v785, %v339
        %v809 = vmul.f32 %v700, %v340
        %v810 = vmul.f32 %v702, %v341
        %v811 = vmul.f32 %v789, %v342
        %v812 = vmul.f32 %v791, %v343
        %v813 = vmul.f32 %v706, %v344
        %v814 = vmul.f32 %v708, %v345
        %v815 = vmul.f32 %v795, %v346
        %v816 = vmul.f32 %v797, %v347
        %v817 = vmul.f32 %v712, %v348
        %v818 = vmul.f32 %v714, %v349
        %v819 = vmul.f32 %v801, %v350
        %v820 = vmul.f32 %v803, %v351
        %v821 = vadd.f32 %v805, %v809
        %v822 = vadd.f32 %v821, %v813
        %v823 = vadd.f32 %v822, %v817
        %v824 = vrot.slane %v823, 4
        %v825 = vadd.f32 %v823, %v824
        %v826 = vrot.slane %v825, 2
        %v827 = vadd.f32 %v825, %v826
        %v828 = vrot.slane %v827, 1
        %v829 = vadd.f32 %v827, %v828
        %v830 = vadd.f32 %v806, %v810
        %v831 = vadd.f32 %v830, %v814
        %v832 = vadd.f32 %v831, %v818
        %v833 = vrot.slane %v832, 4
        %v834 = vadd.f32 %v832, %v833
        %v835 = vrot.slane %v834, 2
        %v836 = vadd.f32 %v834, %v835
        %v837 = vrot.slane %v836, 1
        %v838 = vadd.f32 %v836, %v837
        %v839 = vadd.f32 %v807, %v811
        %v840 = vadd.f32 %v839, %v815
        %v841 = vadd.f32 %v840, %v819
        %v842 = vrot.slane %v841, 4
        %v843 = vadd.f32 %v841, %v842
        %v844 = vrot.slane %v843, 2
        %v845 = vadd.f32 %v843, %v844
        %v846 = vrot.slane %v845, 1
        %v847 = vadd.f32 %v845, %v846
        %v848 = vadd.f32 %v808, %v812
        %v849 = vadd.f32 %v848, %v816
        %v850 = vadd.f32 %v849, %v820
        %v851 = vrot.slane %v850, 4
        %v852 = vadd.f32 %v850, %v851
        %v853 = vrot.slane %v852, 2
        %v854 = vadd.f32 %v852, %v853
        %v855 = vrot.slane %v854, 1
        %v856 = vadd.f32 %v854, %v855
        %v857 = vrcp.pop 32.0
        %v858 = vmul.f32 %v829, %v857
        %v859 = vmul.f32 %v838, %v857
        %v860 = vmul.f32 %v847, %v857
        %v861 = vmul.f32 %v856, %v857
        %v862 = vmax.f32 %v805, %v809
        %v863 = vmax.f32 %v862, %v813
        %v864 = vmax.f32 %v863, %v817
        %v865 = vrot.slane %v864, 4
        %v866 = vmax.f32 %v864, %v865
        %v867 = vrot.slane %v866, 2
        %v868 = vmax.f32 %v866, %v867
        %v869 = vrot.slane %v868, 1
        %v870 = vmax.f32 %v868, %v869
        %v871 = vmax.f32 %v806, %v810
        %v872 = vmax.f32 %v871, %v814
        %v873 = vmax.f32 %v872, %v818
        %v874 = vrot.slane %v873, 4
        %v875 = vmax.f32 %v873, %v874
        %v876 = vrot.slane %v875, 2
        %v877 = vmax.f32 %v875, %v876
        %v878 = vrot.slane %v877, 1
        %v879 = vmax.f32 %v877, %v878
        %v880 = vmax.f32 %v807, %v811
        %v881 = vmax.f32 %v880, %v815
        %v882 = vmax.f32 %v881, %v819
        %v883 = vrot.slane %v882, 4
        %v884 = vmax.f32 %v882, %v883
        %v885 = vrot.slane %v884, 2
        %v886 = vmax.f32 %v884, %v885
        %v887 = vrot.slane %v886, 1
        %v888 = vmax.f32 %v886, %v887
        %v889 = vmax.f32 %v808, %v812
        %v890 = vmax.f32 %v889, %v816
        %v891 = vmax.f32 %v890, %v820
        %v892 = vrot.slane %v891, 4
        %v893 = vmax.f32 %v891, %v892
        %v894 = vrot.slane %v893, 2
        %v895 = vmax.f32 %v893, %v894
        %v896 = vrot.slane %v895, 1
        %v897 = vmax.f32 %v895, %v896
        %v898 = vadd.f32 %v858, %v870
        %v899 = vadd.f32 %v859, %v879
        %v900 = vadd.f32 %v860, %v888
        %v901 = vadd.f32 %v861, %v897
        %v902 = vmax.f32 %v898, 0.0
        %v903 = vmax.f32 %v899, 0.0
        %v904 = vmax.f32 %v900, 0.0
        %v905 = vmax.f32 %v901, 0.0
        %v906 = vmul.f32 %v902, %v336
        %v907 = vmul.f32 %v903, %v337
        %v908 = vmul.f32 %v904, %v338
        %v909 = vmul.f32 %v905, %v339
        %v910 = vmul.f32 %v902, %v340
        %v911 = vmul.f32 %v903, %v341
        %v912 = vmul.f32 %v904, %v342
        %v913 = vmul.f32 %v905, %v343
        %v914 = vmul.f32 %v902, %v344
        %v915 = vmul.f32 %v903, %v345
        %v916 = vmul.f32 %v904, %v346
        %v917 = vmul.f32 %v905, %v347
        %v918 = vmul.f32 %v902, %v348
        %v919 = vmul.f32 %v903, %v349
        %v920 = vmul.f32 %v904, %v350
        %v921 = vmul.f32 %v905, %v351
        %v922 = vld [vmem:[#allocation2] sm:$0xff]
        %v923 = vld [vmem:[#allocation2 + $0x8] sm:$0xff]
        %v924 = vld [vmem:[#allocation2 + $0x10] sm:$0xff]
        %v925 = vld [vmem:[#allocation2 + $0x18] sm:$0xff]
        %v926 = vadd.f32 %v922, %v805
        %v927 = vadd.f32 %v923, %v809
        %v928 = vadd.f32 %v924, %v813
        %v929 = vadd.f32 %v925, %v817
        %930 = vst [vmem:[#allocation2] sm:$0xff] %v926
        %931 = vst [vmem:[#allocation2 + $0x8] sm:$0xff] %v927
        %932 = vst [vmem:[#allocation2 + $0x10] sm:$0xff] %v928
        %933 = vst [vmem:[#allocation2 + $0x18] sm:$0xff] %v929
        %v934 = vld [vmem:[#allocation3] sm:$0xff]
        %v935 = vld [vmem:[#allocation3 + $0x8] sm:$0xff]
        %v936 = vld [vmem:[#allocation3 + $0x10] sm:$0xff]
        %v937 = vld [vmem:[#allocation3 + $0x18] sm:$0xff]
        %v938 = vmax.f32 %v934, %v805
        %v939 = vmax.f32 %v935, %v809
        %v940 = vmax.f32 %v936, %v813
        %v941 = vmax.f32 %v937, %v817
        %942 = vst [vmem:[#allocation3] sm:$0xff] %v938
        %943 = vst [vmem:[#allocation3 + $0x8] sm:$0xff] %v939
        %944 = vst [vmem:[#allocation3 + $0x10] sm:$0xff] %v940
        %945 = vst [vmem:[#allocation3 + $0x18] sm:$0xff] %v941
        %v946 = vld [vmem:[#allocation4] sm:$0xff]
        %v947 = vld [vmem:[#allocation4 + $0x8] sm:$0xff]
        %v948 = vld [vmem:[#allocation4 + $0x10] sm:$0xff]
        %v949 = vld [vmem:[#allocation4 + $0x18] sm:$0xff]
        %v950 = vadd.f32 %v946, %v336
        %v951 = vadd.f32 %v947, %v340
        %v952 = vadd.f32 %v948, %v344
        %v953 = vadd.f32 %v949, %v348
        %954 = vst [vmem:[#allocation4] sm:$0xff] %v950
        %955 = vst [vmem:[#allocation4 + $0x8] sm:$0xff] %v951
        %956 = vst [vmem:[#allocation4 + $0x10] sm:$0xff] %v952
        %957 = vst [vmem:[#allocation4 + $0x18] sm:$0xff] %v953
        %v958 = vld [vmem:[#allocation5] sm:$0xff]
        %v959 = vld [vmem:[#allocation5 + $0x8] sm:$0xff]
        %v960 = vld [vmem:[#allocation5 + $0x10] sm:$0xff]
        %v961 = vld [vmem:[#allocation5 + $0x18] sm:$0xff]
        %v962 = vadd.f32 %v958, %v906
        %v963 = vadd.f32 %v959, %v910
        %v964 = vadd.f32 %v960, %v914
        %v965 = vadd.f32 %v961, %v918
        %966 = vst [vmem:[#allocation5] sm:$0xff] %v962
        %967 = vst [vmem:[#allocation5 + $0x8] sm:$0xff] %v963
        %968 = vst [vmem:[#allocation5 + $0x10] sm:$0xff] %v964
        %969 = vst [vmem:[#allocation5 + $0x18] sm:$0xff] %v965
        %v970 = vld [vmem:[#allocation2] sm:$0xff]
        %v971 = vld [vmem:[#allocation2 + $0x8] sm:$0xff]
        %v972 = vld [vmem:[#allocation2 + $0x10] sm:$0xff]
        %v973 = vld [vmem:[#allocation2 + $0x18] sm:$0xff]
        %v974 = vadd.f32 %v970, %v806
        %v975 = vadd.f32 %v971, %v810
        %v976 = vadd.f32 %v972, %v814
        %v977 = vadd.f32 %v973, %v818
        %978 = vst [vmem:[#allocation2] sm:$0xff] %v974
        %979 = vst [vmem:[#allocation2 + $0x8] sm:$0xff] %v975
        %980 = vst [vmem:[#allocation2 + $0x10] sm:$0xff] %v976
        %981 = vst [vmem:[#allocation2 + $0x18] sm:$0xff] %v977
        %v982 = vld [vmem:[#allocation3] sm:$0xff]
        %v983 = vld [vmem:[#allocation3 + $0x8] sm:$0xff]
        %v984 = vld [vmem:[#allocation3 + $0x10] sm:$0xff]
        %v985 = vld [vmem:[#allocation3 + $0x18] sm:$0xff]
        %v986 = vmax.f32 %v982, %v806
        %v987 = vmax.f32 %v983, %v810
        %v988 = vmax.f32 %v984, %v814
        %v989 = vmax.f32 %v985, %v818
        %990 = vst [vmem:[#allocation3] sm:$0xff] %v986
        %991 = vst [vmem:[#allocation3 + $0x8] sm:$0xff] %v987
        %992 = vst [vmem:[#allocation3 + $0x10] sm:$0xff] %v988
        %993 = vst [vmem:[#allocation3 + $0x18] sm:$0xff] %v989
        %v994 = vld [vmem:[#allocation4] sm:$0xff]
        %v995 = vld [vmem:[#allocation4 + $0x8] sm:$0xff]
        %v996 = vld [vmem:[#allocation4 + $0x10] sm:$0xff]
        %v997 = vld [vmem:[#allocation4 + $0x18] sm:$0xff]
        %v998 = vadd.f32 %v994, %v337
        %v999 = vadd.f32 %v995, %v341
        %v1000 = vadd.f32 %v996, %v345
        %v1001 = vadd.f32 %v997, %v349
        %1002 = vst [vmem:[#allocation4] sm:$0xff] %v998
        %1003 = vst [vmem:[#allocation4 + $0x8] sm:$0xff] %v999
        %1004 = vst [vmem:[#allocation4 + $0x10] sm:$0xff] %v1000
        %1005 = vst [vmem:[#allocation4 + $0x18] sm:$0xff] %v1001
        %v1006 = vld [vmem:[#allocation5] sm:$0xff]
        %v1007 = vld [vmem:[#allocation5 + $0x8] sm:$0xff]
        %v1008 = vld [vmem:[#allocation5 + $0x10] sm:$0xff]
        %v1009 = vld [vmem:[#allocation5 + $0x18] sm:$0xff]
        %v1010 = vadd.f32 %v1006, %v907
        %v1011 = vadd.f32 %v1007, %v911
        %v1012 = vadd.f32 %v1008, %v915
        %v1013 = vadd.f32 %v1009, %v919
        %1014 = vst [vmem:[#allocation5] sm:$0xff] %v1010
        %1015 = vst [vmem:[#allocation5 + $0x8] sm:$0xff] %v1011
        %1016 = vst [vmem:[#allocation5 + $0x10] sm:$0xff] %v1012
        %1017 = vst [vmem:[#allocation5 + $0x18] sm:$0xff] %v1013
        %v1018 = vld [vmem:[#allocation2] sm:$0xff]
        %v1019 = vld [vmem:[#allocation2 + $0x8] sm:$0xff]
        %v1020 = vld [vmem:[#allocation2 + $0x10] sm:$0xff]
        %v1021 = vld [vmem:[#allocation2 + $0x18] sm:$0xff]
        %v1022 = vadd.f32 %v1018, %v807
        %v1023 = vadd.f32 %v1019, %v811
        %v1024 = vadd.f32 %v1020, %v815
        %v1025 = vadd.f32 %v1021, %v819
        %1026 = vst [vmem:[#allocation2] sm:$0xff] %v1022
        %1027 = vst [vmem:[#allocation2 + $0x8] sm:$0xff] %v1023
        %1028 = vst [vmem:[#allocation2 + $0x10] sm:$0xff] %v1024
        %1029 = vst [vmem:[#allocation2 + $0x18] sm:$0xff] %v1025
        %v1030 = vld [vmem:[#allocation3] sm:$0xff]
        %v1031 = vld [vmem:[#allocation3 + $0x8] sm:$0xff]
        %v1032 = vld [vmem:[#allocation3 + $0x10] sm:$0xff]
        %v1033 = vld [vmem:[#allocation3 + $0x18] sm:$0xff]
        %v1034 = vmax.f32 %v1030, %v807
        %v1035 = vmax.f32 %v1031, %v811
        %v1036 = vmax.f32 %v1032, %v815
        %v1037 = vmax.f32 %v1033, %v819
        %1038 = vst [vmem:[#allocation3] sm:$0xff] %v1034
        %1039 = vst [vmem:[#allocation3 + $0x8] sm:$0xff] %v1035
        %1040 = vst [vmem:[#allocation3 + $0x10] sm:$0xff] %v1036
        %1041 = vst [vmem:[#allocation3 + $0x18] sm:$0xff] %v1037
        %v1042 = vld [vmem:[#allocation4] sm:$0xff]
        %v1043 = vld [vmem:[#allocation4 + $0x8] sm:$0xff]
        %v1044 = vld [vmem:[#allocation4 + $0x10] sm:$0xff]
        %v1045 = vld [vmem:[#allocation4 + $0x18] sm:$0xff]
        %v1046 = vadd.f32 %v1042, %v338
        %v1047 = vadd.f32 %v1043, %v342
        %v1048 = vadd.f32 %v1044, %v346
        %v1049 = vadd.f32 %v1045, %v350
        %1050 = vst [vmem:[#allocation4] sm:$0xff] %v1046
        %1051 = vst [vmem:[#allocation4 + $0x8] sm:$0xff] %v1047
        %1052 = vst [vmem:[#allocation4 + $0x10] sm:$0xff] %v1048
        %1053 = vst [vmem:[#allocation4 + $0x18] sm:$0xff] %v1049
        %v1054 = vld [vmem:[#allocation5] sm:$0xff]
        %v1055 = vld [vmem:[#allocation5 + $0x8] sm:$0xff]
        %v1056 = vld [vmem:[#allocation5 + $0x10] sm:$0xff]
        %v1057 = vld [vmem:[#allocation5 + $0x18] sm:$0xff]
        %v1058 = vadd.f32 %v1054, %v908
        %v1059 = vadd.f32 %v1055, %v912
        %v1060 = vadd.f32 %v1056, %v916
        %v1061 = vadd.f32 %v1057, %v920
        %1062 = vst [vmem:[#allocation5] sm:$0xff] %v1058
        %1063 = vst [vmem:[#allocation5 + $0x8] sm:$0xff] %v1059
        %1064 = vst [vmem:[#allocation5 + $0x10] sm:$0xff] %v1060
        %1065 = vst [vmem:[#allocation5 + $0x18] sm:$0xff] %v1061
        %v1066 = vld [vmem:[#allocation2] sm:$0xff]
        %v1067 = vld [vmem:[#allocation2 + $0x8] sm:$0xff]
        %v1068 = vld [vmem:[#allocation2 + $0x10] sm:$0xff]
        %v1069 = vld [vmem:[#allocation2 + $0x18] sm:$0xff]
        %v1070 = vadd.f32 %v1066, %v808
        %v1071 = vadd.f32 %v1067, %v812
        %v1072 = vadd.f32 %v1068, %v816
        %v1073 = vadd.f32 %v1069, %v820
        %1074 = vst [vmem:[#allocation2] sm:$0xff] %v1070
        %1075 = vst [vmem:[#allocation2 + $0x8] sm:$0xff] %v1071
        %1076 = vst [vmem:[#allocation2 + $0x10] sm:$0xff] %v1072
        %1077 = vst [vmem:[#allocation2 + $0x18] sm:$0xff] %v1073
        %v1078 = vld [vmem:[#allocation3] sm:$0xff]
        %v1079 = vld [vmem:[#allocation3 + $0x8] sm:$0xff]
        %v1080 = vld [vmem:[#allocation3 + $0x10] sm:$0xff]
        %v1081 = vld [vmem:[#allocation3 + $0x18] sm:$0xff]
        %v1082 = vmax.f32 %v1078, %v808
        %v1083 = vmax.f32 %v1079, %v812
        %v1084 = vmax.f32 %v1080, %v816
        %v1085 = vmax.f32 %v1081, %v820
        %1086 = vst [vmem:[#allocation3] sm:$0xff] %v1082
        %1087 = vst [vmem:[#allocation3 + $0x8] sm:$0xff] %v1083
        %1088 = vst [vmem:[#allocation3 + $0x10] sm:$0xff] %v1084
        %1089 = vst [vmem:[#allocation3 + $0x18] sm:$0xff] %v1085
        %v1090 = vld [vmem:[#allocation4] sm:$0xff]
        %v1091 = vld [vmem:[#allocation4 + $0x8] sm:$0xff]
        %v1092 = vld [vmem:[#allocation4 + $0x10] sm:$0xff]
        %v1093 = vld [vmem:[#allocation4 + $0x18] sm:$0xff]
        %v1094 = vadd.f32 %v1090, %v339
        %v1095 = vadd.f32 %v1091, %v343
        %v1096 = vadd.f32 %v1092, %v347
        %v1097 = vadd.f32 %v1093, %v351
        %1098 = vst [vmem:[#allocation4] sm:$0xff] %v1094
        %1099 = vst [vmem:[#allocation4 + $0x8] sm:$0xff] %v1095
        %1100 = vst [vmem:[#allocation4 + $0x10] sm:$0xff] %v1096
        %1101 = vst [vmem:[#allocation4 + $0x18] sm:$0xff] %v1097
        %v1102 = vld [vmem:[#allocation5] sm:$0xff]
        %v1103 = vld [vmem:[#allocation5 + $0x8] sm:$0xff]
        %v1104 = vld [vmem:[#allocation5 + $0x10] sm:$0xff]
        %v1105 = vld [vmem:[#allocation5 + $0x18] sm:$0xff]
        %v1106 = vadd.f32 %v1102, %v909
        %v1107 = vadd.f32 %v1103, %v913
        %v1108 = vadd.f32 %v1104, %v917
        %v1109 = vadd.f32 %v1105, %v921
        %1110 = vst [vmem:[#allocation5] sm:$0xff] %v1106
        %1111 = vst [vmem:[#allocation5 + $0x8] sm:$0xff] %v1107
        %1112 = vst [vmem:[#allocation5 + $0x10] sm:$0xff] %v1108
        %1113 = vst [vmem:[#allocation5 + $0x18] sm:$0xff] %v1109
        %p1114 = scmp.eq.s32.totalorder %s26, 1
        // Predicated region
        $region57: #{tpu_custom_call.1} parent=47 // pred_check
          %p1115 = pneg %p1114
        $region58: #{tpu_custom_call.1} parent=47 // pred_check_branch
          %1117 = sbr.rel (%p1115) target = $region60
        $region59: #{tpu_custom_call.1} parent=47 // pred_region
          %v1118 = vld [vmem:[#allocation2] sm:$0xff]
          %v1119 = vld [vmem:[#allocation2 + $0x8] sm:$0xff]
          %v1120 = vld [vmem:[#allocation2 + $0x10] sm:$0xff]
          %v1121 = vld [vmem:[#allocation2 + $0x18] sm:$0xff]
          %1122 = vadd.xlane.f32.xlu0 %v1118
          %v1123 = vpop.xlane.xlu0 %1122
          %1124 = vadd.xlane.f32.xlu0 %v1119
          %v1125 = vpop.xlane.xlu0 %1124
          %1126 = vadd.xlane.f32.xlu0 %v1120
          %v1127 = vpop.xlane.xlu0 %1126
          %1128 = vadd.xlane.f32.xlu0 %v1121
          %v1129 = vpop.xlane.xlu0 %1128
          %v1130 = vld [vmem:[#allocation3] sm:$0xff]
          %v1131 = vld [vmem:[#allocation3 + $0x8] sm:$0xff]
          %v1132 = vld [vmem:[#allocation3 + $0x10] sm:$0xff]
          %v1133 = vld [vmem:[#allocation3 + $0x18] sm:$0xff]
          %1134 = vmax.xlane.f32.xlu0 %v1130
          %v1135 = vpop.xlane.xlu0 %1134
          %1136 = vmax.xlane.f32.xlu0 %v1131
          %v1137 = vpop.xlane.xlu0 %1136
          %1138 = vmax.xlane.f32.xlu0 %v1132
          %v1139 = vpop.xlane.xlu0 %1138
          %1140 = vmax.xlane.f32.xlu0 %v1133
          %v1141 = vpop.xlane.xlu0 %1140
          %v1142 = vld [vmem:[#allocation4] sm:$0xff]
          %v1143 = vld [vmem:[#allocation4 + $0x8] sm:$0xff]
          %v1144 = vld [vmem:[#allocation4 + $0x10] sm:$0xff]
          %v1145 = vld [vmem:[#allocation4 + $0x18] sm:$0xff]
          %1146 = vadd.xlane.f32.xlu0 %v1142
          %v1147 = vpop.xlane.xlu0 %1146
          %1148 = vadd.xlane.f32.xlu0 %v1143
          %v1149 = vpop.xlane.xlu0 %1148
          %1150 = vadd.xlane.f32.xlu0 %v1144
          %v1151 = vpop.xlane.xlu0 %1150
          %1152 = vadd.xlane.f32.xlu0 %v1145
          %v1153 = vpop.xlane.xlu0 %1152
          %v1154 = vld [vmem:[#allocation5] sm:$0xff]
          %v1155 = vld [vmem:[#allocation5 + $0x8] sm:$0xff]
          %v1156 = vld [vmem:[#allocation5 + $0x10] sm:$0xff]
          %v1157 = vld [vmem:[#allocation5 + $0x18] sm:$0xff]
          %1158 = vadd.xlane.f32.xlu0 %v1154
          %v1159 = vpop.xlane.xlu0 %1158
          %1160 = vadd.xlane.f32.xlu0 %v1155
          %v1161 = vpop.xlane.xlu0 %1160
          %1162 = vadd.xlane.f32.xlu0 %v1156
          %v1163 = vpop.xlane.xlu0 %1162
          %1164 = vadd.xlane.f32.xlu0 %v1157
          %v1165 = vpop.xlane.xlu0 %1164
          %v1166 = vmul.f32 %v1123, 0.0009765625
          %v1167 = vmul.f32 %v1125, 0.0009765625
          %v1168 = vmul.f32 %v1127, 0.0009765625
          %v1169 = vmul.f32 %v1129, 0.0009765625
          %v1170 = vadd.f32 %v1166, %v1135
          %v1171 = vadd.f32 %v1167, %v1137
          %v1172 = vadd.f32 %v1168, %v1139
          %v1173 = vadd.f32 %v1169, %v1141
          %v1174 = vld [vmem:[%s5] sm:$0x3]
          %v1176 = vsel %vm388, %v1174, 0
          %1178 = vmatprep.subr.mxu0 0.0
          %1179 = vmatpush1.msra.mxu0 %v1170
          %1180 = vmatprep.subr.mxu0 0.0
          %1181 = vmatpush1.msra.mxu0 %v1171
          %1182 = vmatprep.subr.mxu0 0.0
          %1183 = vmatpush1.msra.mxu0 %v1172
          %1184 = vmatprep.subr.mxu0 0.0
          %1185 = vmatpush1.msra.mxu0 %v1173
          %1186 = vmatprep.subr.mxu0 0.0
          %1187 = vmatpush1.msra.mxu0 0.0
          %1188 = vmatprep.subr.mxu0 0.0
          %1189 = vmatpush1.msra.mxu0 0.0
          %1190 = vmatprep.subr.mxu0 0.0
          %1191 = vmatpush1.msra.mxu0 0.0
          %1192 = vmatprep.subr.mxu0 0.0
          %1193 = vmatpush1.msra.mxu0 0.0
          %1194 = vmatprep.subr.mxu0 0.0
          %1195 = vmatpush1.msra.mxu0 0.0
          %1196 = vmatprep.subr.mxu0 0.0
          %1197 = vmatpush1.msra.mxu0 0.0
          %1198 = vmatprep.subr.mxu0 0.0
          %1199 = vmatpush1.msra.mxu0 0.0
          %1200 = vmatprep.subr.mxu0 0.0
          %1201 = vmatpush1.msra.mxu0 0.0
          %1202 = vmatprep.subr.mxu0 0.0
          %1203 = vmatpush1.msra.mxu0 0.0
          %1204 = vmatprep.subr.mxu0 0.0
          %1205 = vmatpush1.msra.mxu0 0.0
          %1206 = vmatprep.subr.mxu0 0.0
          %1207 = vmatpush1.msra.mxu0 0.0
          %1208 = vmatprep.subr.mxu0 0.0
          %1209 = vmatpush1.msra.mxu0 0.0
          %1210 = vmatprep.subr.mxu0 0.0
          %1211 = vmatpush1.msra.mxu0 0.0
          %1212 = vmatprep.subr.mxu0 0.0
          %1213 = vmatpush1.msra.mxu0 0.0
          %1214 = vmatprep.subr.mxu0 0.0
          %1215 = vmatpush1.msra.mxu0 0.0
          %1216 = vmatprep.subr.mxu0 0.0
          %1217 = vmatpush1.msra.mxu0 0.0
          %1218 = vmatprep.subr.mxu0 0.0
          %1219 = vmatpush1.msra.mxu0 0.0
          %1220 = vmatprep.subr.mxu0 0.0
          %1221 = vmatpush1.msra.mxu0 0.0
          %1222 = vmatprep.subr.mxu0 0.0
          %1223 = vmatpush1.msra.mxu0 0.0
          %1224 = vmatprep.subr.mxu0 0.0
          %1225 = vmatpush1.msra.mxu0 0.0
          %1226 = vmatprep.subr.mxu0 0.0
          %1227 = vmatpush1.msra.mxu0 0.0
          %1228 = vmatprep.subr.mxu0 0.0
          %1229 = vmatpush1.msra.mxu0 0.0
          %1230 = vmatprep.subr.mxu0 0.0
          %1231 = vmatpush1.msra.mxu0 0.0
          %1232 = vmatprep.subr.mxu0 0.0
          %1233 = vmatpush1.msra.mxu0 0.0
          %1234 = vmatprep.subr.mxu0 0.0
          %1235 = vmatpush1.msra.mxu0 0.0
          %1236 = vmatprep.subr.mxu0 0.0
          %1237 = vmatpush1.msra.mxu0 0.0
          %1238 = vmatprep.subr.mxu0 0.0
          %1239 = vmatpush1.msra.mxu0 0.0
          %1240 = vmatprep.subr.mxu0 0.0
          %1241 = vmatpush1.msra.mxu0 0.0
          %1242 = vmatprep.mubr.f32.mxu0 0.0
          %1243 = vmatmul.mubr.f32.gmra.mrb[0].mxu0 %v1176
          %v1244 = vpop.f32.mrb[0].mxu0
          %v1245 = vadd.f32 0.0, %v1244
          %v1246 = vpop.f32.mrb[0].mxu0
          %1247 = vdwg.mxu0
          %v1248 = vmax.f32 %v1245, 0.0
          %v1249 = vld [vmem:[%s6] sm:$0xff]
          %v1250 = vld [vmem:[%s6 + $0x8] sm:$0xff]
          %v1251 = vld [vmem:[%s6 + $0x10] sm:$0xff]
          %v1252 = vld [vmem:[%s6 + $0x18] sm:$0xff]
          %vm1253 = vcmask 15360
          %v1255 = vsel %vm1253, %v1249, 0
          %v1258 = vsel %vm1253, %v1250, 0
          %v1261 = vsel %vm1253, %v1251, 0
          %v1264 = vsel %vm1253, %v1252, 0
          %vm1266 = vcmask 1041408
          %v1268 = vsel %vm1266, %v1248, 0
          %1270 = vmatprep.subr.mxu0 0.0
          %1271 = vmatpush1.msra.mxu0 %v1268
          %1272 = vmatprep.subr.mxu0 0.0
          %1273 = vmatpush1.msra.mxu0 0.0
          %1274 = vmatprep.subr.mxu0 0.0
          %1275 = vmatpush1.msra.mxu0 0.0
          %1276 = vmatprep.subr.mxu0 0.0
          %1277 = vmatpush1.msra.mxu0 0.0
          %1278 = vmatprep.subr.mxu0 0.0
          %1279 = vmatpush1.msra.mxu0 0.0
          %1280 = vmatprep.subr.mxu0 0.0
          %1281 = vmatpush1.msra.mxu0 0.0
          %1282 = vmatprep.subr.mxu0 0.0
          %1283 = vmatpush1.msra.mxu0 0.0
          %1284 = vmatprep.subr.mxu0 0.0
          %1285 = vmatpush1.msra.mxu0 0.0
          %1286 = vmatprep.subr.mxu0 0.0
          %1287 = vmatpush1.msra.mxu0 0.0
          %1288 = vmatprep.subr.mxu0 0.0
          %1289 = vmatpush1.msra.mxu0 0.0
          %1290 = vmatprep.subr.mxu0 0.0
          %1291 = vmatpush1.msra.mxu0 0.0
          %1292 = vmatprep.subr.mxu0 0.0
          %1293 = vmatpush1.msra.mxu0 0.0
          %1294 = vmatprep.subr.mxu0 0.0
          %1295 = vmatpush1.msra.mxu0 0.0
          %1296 = vmatprep.subr.mxu0 0.0
          %1297 = vmatpush1.msra.mxu0 0.0
          %1298 = vmatprep.subr.mxu0 0.0
          %1299 = vmatpush1.msra.mxu0 0.0
          %1300 = vmatprep.subr.mxu0 0.0
          %1301 = vmatpush1.msra.mxu0 0.0
          %1302 = vmatprep.subr.mxu0 0.0
          %1303 = vmatpush1.msra.mxu0 0.0
          %1304 = vmatprep.subr.mxu0 0.0
          %1305 = vmatpush1.msra.mxu0 0.0
          %1306 = vmatprep.subr.mxu0 0.0
          %1307 = vmatpush1.msra.mxu0 0.0
          %1308 = vmatprep.subr.mxu0 0.0
          %1309 = vmatpush1.msra.mxu0 0.0
          %1310 = vmatprep.subr.mxu0 0.0
          %1311 = vmatpush1.msra.mxu0 0.0
          %1312 = vmatprep.subr.mxu0 0.0
          %1313 = vmatpush1.msra.mxu0 0.0
          %1314 = vmatprep.subr.mxu0 0.0
          %1315 = vmatpush1.msra.mxu0 0.0
          %1316 = vmatprep.subr.mxu0 0.0
          %1317 = vmatpush1.msra.mxu0 0.0
          %1318 = vmatprep.subr.mxu0 0.0
          %1319 = vmatpush1.msra.mxu0 0.0
          %1320 = vmatprep.subr.mxu0 0.0
          %1321 = vmatpush1.msra.mxu0 0.0
          %1322 = vmatprep.subr.mxu0 0.0
          %1323 = vmatpush1.msra.mxu0 0.0
          %1324 = vmatprep.subr.mxu0 0.0
          %1325 = vmatpush1.msra.mxu0 0.0
          %1326 = vmatprep.subr.mxu0 0.0
          %1327 = vmatpush1.msra.mxu0 0.0
          %1328 = vmatprep.subr.mxu0 0.0
          %1329 = vmatpush1.msra.mxu0 0.0
          %1330 = vmatprep.subr.mxu0 0.0
          %1331 = vmatpush1.msra.mxu0 0.0
          %1332 = vmatprep.subr.mxu0 0.0
          %1333 = vmatpush1.msra.mxu0 0.0
          %1334 = vmatprep.mubr.f32.mxu0 0.0
          %1335 = vmatmul.mubr.f32.gmra.mrb[0].mxu0 %v1255
          %v1336 = vpop.f32.mrb[0].mxu0
          %v1337 = vadd.f32 0.0, %v1336
          %v1338 = vpop.f32.mrb[0].mxu0
          %1339 = vmatprep.mubr.f32.mxu0 0.0
          %1340 = vmatmul.mubr.f32.gmra.mrb[0].mxu0 %v1258
          %v1341 = vpop.f32.mrb[0].mxu0
          %v1342 = vadd.f32 0.0, %v1341
          %v1343 = vpop.f32.mrb[0].mxu0
          %1344 = vmatprep.mubr.f32.mxu0 0.0
          %1345 = vmatmul.mubr.f32.gmra.mrb[0].mxu0 %v1261
          %v1346 = vpop.f32.mrb[0].mxu0
          %v1347 = vadd.f32 0.0, %v1346
          %v1348 = vpop.f32.mrb[0].mxu0
          %1349 = vmatprep.mubr.f32.mxu0 0.0
          %1350 = vmatmul.mubr.f32.gmra.mrb[0].mxu0 %v1264
          %v1351 = vpop.f32.mrb[0].mxu0
          %v1352 = vadd.f32 0.0, %v1351
          %v1353 = vpop.f32.mrb[0].mxu0
          %1354 = vdwg.mxu0
          %v1355 = vmul.f32 %v1147, 0.0009765625
          %v1356 = vmul.f32 %v1149, 0.0009765625
          %v1357 = vmul.f32 %v1151, 0.0009765625
          %v1358 = vmul.f32 %v1153, 0.0009765625
          %v1359 = vmul.f32 %v1337, %v1355
          %v1360 = vmul.f32 %v1342, %v1356
          %v1361 = vmul.f32 %v1347, %v1357
          %v1362 = vmul.f32 %v1352, %v1358
          %v1363 = vmul.f32 %v1159, 0.0009765625
          %v1364 = vmul.f32 %v1161, 0.0009765625
          %v1365 = vmul.f32 %v1163, 0.0009765625
          %v1366 = vmul.f32 %v1165, 0.0009765625
          %vm1367 = vcmask 7168
          %1368 = vst.msk [vmem:[%s315] sm:$0xff] %vm1367, %v1359
          %1369 = vst.msk [vmem:[%s315 + $0x8] sm:$0xff] %vm1367, %v1360
          %1370 = vst.msk [vmem:[%s315 + $0x10] sm:$0xff] %vm1367, %v1361
          %1371 = vst.msk [vmem:[%s315 + $0x18] sm:$0xff] %vm1367, %v1362
          %1372 = vst.msk [vmem:[%s315 + $0x20] sm:$0xff] %vm1367, %v1363
          %1373 = vst.msk [vmem:[%s315 + $0x28] sm:$0xff] %vm1367, %v1364
          %1374 = vst.msk [vmem:[%s315 + $0x30] sm:$0xff] %vm1367, %v1365
          %1375 = vst.msk [vmem:[%s315 + $0x38] sm:$0xff] %vm1367, %v1366
        $region60: #{tpu_custom_call.1} parent=47 // pred_fallthru
          _
        %p1376 = scmp.lt.s32.totalorder %s25, 1
        %s1377 = scalar_select %p1376, %s25, 1
        %s1378 = smul.addr %s1377, 8
        %s1379 = smul.addr %s1378, 8
        %s1380 = scalar_lea.vmem %s7, %s1379
        // Predicated region
        $region61: #{tpu_custom_call.1} parent=47 // pred_check
          %p1381 = pneg %p205
        $region62: #{tpu_custom_call.1} parent=47 // pred_check_branch
          %1383 = sbr.rel (%p1381) target = $region64
        $region63: #{tpu_custom_call.1} parent=47 // pred_region
          _
        $region64: #{tpu_custom_call.1} parent=47 // pred_fallthru
          _
      $region48: #{tpu_custom_call.1} parent=5 // pred_fallthru
        _
      %p1384 = scmp.le.s32.totalorder 2, %s16
      // Predicated region
      $region65: #{tpu_custom_call.1} parent=5 // pred_check
        %p1385 = pneg %p1384
      $region66: #{tpu_custom_call.1} parent=5 // pred_check_branch
        %1387 = sbr.rel (%p1385) target = $region68
      $region67: #{tpu_custom_call.1} parent=5 // pred_region
        %s1388 = ssub.s32 %s16, 2
        // Predicated region
        $region69: #{tpu_custom_call.1} parent=67 // pred_check
          %p1389 = pneg %p211
        $region70: #{tpu_custom_call.1} parent=67 // pred_check_branch
          %1391 = sbr.rel (%p1389) target = $region72
        $region71: #{tpu_custom_call.1} parent=67 // pred_region
          %p1392 = scmp.lt.s32.totalorder %s27, 1
          %s1393 = scalar_select %p1392, %s27, 1
          %s1394 = smul.addr %s1393, 8
          %s1395 = smul.addr %s1394, 8
          %s1396 = scalar_lea.vmem %s7, %s1395
        $region72: #{tpu_custom_call.1} parent=67 // pred_fallthru
          _
      $region68: #{tpu_custom_call.1} parent=5 // pred_fallthru
        _
    $region6: #{tpu_custom_call.1} parent=1 // loop_footer
      %s20 = sadd.s32 1, %s16
    $region7: #{tpu_custom_call.1} parent=1 // loop_footer_branch
      %15 = sbr.rel target = $region3
    $region8: #{tpu_custom_call.1} parent=1 // loop_exit
      _
    %1397 = vsyncpa [#allocation7], 1
    %s1398 = scalar_lea.sflag [#allocation7], 1
    %1399 = vsyncpa %s1398, 1

</llo_original>
